<compile_context>
chip_gen: v7x
topology: tpu7x:2x2x1
jax: 0.10.0
libtpu: 0.0.40
codegen_flags: <defaults>
</compile_context>

<pallas_src>
import functools

import jax
import jax.numpy as jnp
from jax.experimental import pallas as pl
from jax.experimental.pallas import tpu as pltpu


def _qrnn3d_kernel(patch_ref, w_ref, b_ref, out_ref, z_ref, f_ref, *,
                   T, S, hid, reverse, act, unroll):
    # patch_ref : (27*Cin, T*S)   im2col patches (compute dtype, e.g. bf16)
    # w_ref     : (2*hid, 27*Cin) fused conv weight (compute dtype)
    # b_ref     : (2*hid, 1)      bias, f32
    # out_ref   : (T, hid, S)     output block for this (batch, H-tile), f32
    # z_ref/f_ref: (T, hid, S)    f32 VMEM scratch, time-major for the loop

    # --- Fused conv-as-matmul: (2h, K) @ (K, T*S) -> (2h, T*S), f32 accum ----
    gates = jnp.dot(w_ref[...], patch_ref[...],
                    preferred_element_type=jnp.float32)
    gates = gates + b_ref[...]                     # (2h, T*S) + (2h, 1)

    # --- Gate nonlinearities (lane-dense), stored time-major ----------------
    for t in range(T):                             # static slices at trace time
        g_t = gates[:, t * S:(t + 1) * S]          # (2h, S), S % 128 == 0
        if act == "tanh":
            z_ref[t] = jnp.tanh(g_t[:hid])
        elif act == "relu":
            z_ref[t] = jnp.maximum(g_t[:hid], 0.0)
        else:                                      # 'none'
            z_ref[t] = g_t[:hid]
        f_ref[t] = jax.nn.sigmoid(g_t[hid:])

    # --- Sequential QRNN recurrence over time (f32) --------------------------
    def step(i, h):
        t = (T - 1 - i) if reverse else i
        f_t = f_ref[t]
        h = f_t * h + (1.0 - f_t) * z_ref[t]
        out_ref[t] = h
        return h

    jax.lax.fori_loop(0, T, step, jnp.zeros((hid, S), jnp.float32),
                      unroll=unroll)


def _auto_tile_h(H, W):
    """Smallest H-tile whose flattened per-timestep width (tile_h*W) is a
    lane-dense multiple of 128 (falls back gracefully)."""
    divisors = [d for d in range(1, H + 1) if H % d == 0]
    for d in divisors:
        if (d * W) % 128 == 0:
            return d
    for d in divisors:
        if d * W >= 128:
            return d
    return H


def qrnn3d_layer(x_ncdhw, weight, bias, *, reverse=False, act="tanh",
                 compute_dtype=jnp.bfloat16, tile_h=None):
    """x_ncdhw: (B, Cin, T, H, W); weight: (2h, Cin, 3, 3, 3); bias: (2h,).
    Returns (B, hidden, T, H, W) matching the PyTorch module."""
    B, Cin, T, H, W = x_ncdhw.shape
    twoh = weight.shape[0]
    hid = twoh // 2
    Kc = 27 * Cin

    if tile_h is None:
        tile_h = _auto_tile_h(H, W)
    assert H % tile_h == 0, (H, tile_h)
    n_h = H // tile_h
    S = tile_h * W            # lane width per time step
    N = T * S                 # lane width per grid block

    # ---- wrapper glue: im2col + re-tiling (plain XLA, outside the kernel) ---
    # TODO(synk): for production-size volumes, build the 27-tap patches per
    # H-tile inside the kernel (pltpu.roll / shifted DMA) instead of
    # materializing the 27x-expanded im2col tensor in HBM.
    xpad = jnp.pad(x_ncdhw, ((0, 0), (0, 0), (1, 1), (1, 1), (1, 1)))
    taps = [xpad[:, :, dt:dt + T, dy:dy + H, dx:dx + W]
            for dt in range(3) for dy in range(3) for dx in range(3)]
    patches = jnp.concatenate(taps, axis=1)               # (B, 27*Cin, T, H, W)
    patches = patches.reshape(B, Kc, T, n_h, tile_h, W)
    patches = jnp.transpose(patches, (0, 3, 1, 2, 4, 5))  # (B, n_h, K, T, th, W)
    patches = patches.reshape(B, n_h, Kc, N).astype(compute_dtype)

    # Fused weight: contraction axis ordered (dt, dy, dx, cin), out-ch leading.
    w_fused = jnp.transpose(weight, (2, 3, 4, 1, 0)).reshape(Kc, twoh)
    w_fused = w_fused.T.astype(compute_dtype)              # (2h, 27*Cin)
    b2 = bias.reshape(twoh, 1).astype(jnp.float32)

    kernel = functools.partial(_qrnn3d_kernel, T=T, S=S, hid=hid,
                               reverse=bool(reverse), act=act,
                               unroll=(T <= 16))

    out = pl.pallas_call(
        kernel,
        out_shape=jax.ShapeDtypeStruct((B, n_h, T, hid, S), jnp.float32),
        grid=(B, n_h),
        in_specs=[
            pl.BlockSpec((None, None, Kc, N), lambda b, hi: (b, hi, 0, 0)),
            pl.BlockSpec((twoh, Kc), lambda b, hi: (0, 0)),
            pl.BlockSpec((twoh, 1), lambda b, hi: (0, 0)),
        ],
        out_specs=pl.BlockSpec((None, None, T, hid, S),
                               lambda b, hi: (b, hi, 0, 0, 0)),
        scratch_shapes=[pltpu.VMEM((T, hid, S), jnp.float32),
                        pltpu.VMEM((T, hid, S), jnp.float32)],
        compiler_params=pltpu.CompilerParams(
            dimension_semantics=("parallel", "parallel"),
            vmem_limit_bytes=32 * 1024 * 1024),
    )(patches, w_fused, b2)

    # (B, n_h, T, hid, tile_h*W) -> (B, hid, T, H, W)  (PyTorch layout)
    out = out.reshape(B, n_h, T, hid, tile_h, W)
    out = jnp.transpose(out, (0, 3, 2, 1, 4, 5)).reshape(B, hid, T, H, W)
    return out.astype(x_ncdhw.dtype)


def qrnn3d_reference(x_ncdhw, weight, bias, *, reverse=False):
    """Pure-JAX reference matching the PyTorch module exactly (act='tanh')."""
    twoh = weight.shape[0]
    hid = twoh // 2
    gates = jax.lax.conv_general_dilated(
        x_ncdhw, weight, window_strides=(1, 1, 1),
        padding=((1, 1), (1, 1), (1, 1)),
        dimension_numbers=("NCDHW", "OIDHW", "NCDHW"))
    gates = gates + bias[None, :, None, None, None]
    Z = jnp.tanh(gates[:, :hid])
    F = jax.nn.sigmoid(gates[:, hid:])
    T = x_ncdhw.shape[2]
    h = None
    hs = [None] * T
    order = range(T - 1, -1, -1) if reverse else range(T)
    for t in order:
        z, f = Z[:, :, t], F[:, :, t]
        h = (1 - f) * z if h is None else f * h + (1 - f) * z
        hs[t] = h
    return jnp.stack(hs, axis=2)


if __name__ == "__main__":
    # Small shapes consistent with the module: batch=2, in_ch=4, hidden=8,
    # time=8, spatial=16x16.  Conv3d weight: (2*hidden, in_ch, 3, 3, 3).
    B, Cin, hidden, T, H, W = 2, 4, 8, 8, 16, 16
    key = jax.random.PRNGKey(0)
    kx, kw, kb = jax.random.split(key, 3)
    x = jax.random.normal(kx, (B, Cin, T, H, W), jnp.float32)
    weight = jax.random.normal(kw, (2 * hidden, Cin, 3, 3, 3), jnp.float32) * 0.1
    bias = jax.random.normal(kb, (2 * hidden,), jnp.float32) * 0.1

    # f32 matmul path: tight check against the pure-JAX reference (fwd + rev).
    for rev in (False, True):
        out = jax.block_until_ready(
            qrnn3d_layer(x, weight, bias, reverse=rev,
                         compute_dtype=jnp.float32))
        ref = qrnn3d_reference(x, weight, bias, reverse=rev)
        assert out.shape == (B, hidden, T, H, W), out.shape
        err = float(jnp.max(jnp.abs(out - ref)))
        assert jnp.allclose(out, ref, rtol=1e-4, atol=1e-4), (rev, err)

    # bf16 matmul path (default; v6e/v7x MXU): bf16 products are exact in the
    # f32 accumulator, so compare against the reference fed bf16-rounded
    # inputs -- only accumulation order differs.
    out_bf = jax.block_until_ready(qrnn3d_layer(x, weight, bias, reverse=False))
    x_r = x.astype(jnp.bfloat16).astype(jnp.float32)
    w_r = weight.astype(jnp.bfloat16).astype(jnp.float32)
    ref_bf = qrnn3d_reference(x_r, w_r, bias, reverse=False)
    err_bf = float(jnp.max(jnp.abs(out_bf - ref_bf)))
    assert jnp.allclose(out_bf, ref_bf, rtol=5e-3, atol=5e-3), err_bf

    print("KERNEL_OK")
</pallas_src>

<mosaic_0001>
module attributes {stable_mosaic.version = 11 : i64} {
  func.func @_qrnn3d_kernel(%arg0: i32, %arg1: i32, %arg2: memref<1x1x108x1024xf32, #tpu.memory_space<vmem>>, %arg3: memref<16x108xf32, #tpu.memory_space<vmem>>, %arg4: memref<16x1xf32, #tpu.memory_space<vmem>>, %arg5: memref<1x1x8x8x128xf32, #tpu.memory_space<vmem>>, %arg6: memref<8x8x128xf32, #tpu.memory_space<vmem>>, %arg7: memref<8x8x128xf32, #tpu.memory_space<vmem>>) attributes {dimension_semantics = [#tpu.dimension_semantics<parallel>, #tpu.dimension_semantics<parallel>], iteration_bounds = array<i64: 2, 2>, scalar_prefetch = 0 : i64, scratch_operands = 2 : i64, tpu.core_type = #tpu.core_type<tc>, window_params = [{transform_indices = @transform_0, window_bounds = array<i64: 1, 1, 108, 1024>}, {pipeline_mode = #tpu.pipeline_mode<synchronous>, transform_indices = @transform_1, window_bounds = array<i64: 16, 108>}, {pipeline_mode = #tpu.pipeline_mode<synchronous>, transform_indices = @transform_2, window_bounds = array<i64: 16, 1>}, {transform_indices = @transform_3, window_bounds = array<i64: 1, 1, 8, 8, 128>}]} {
    %c0 = arith.constant 0 : index
    %c0_0 = arith.constant 0 : index
    %0 = vector.load %arg3[%c0, %c0_0] : memref<16x108xf32, #tpu.memory_space<vmem>>, vector<16x108xf32>
    %c0_1 = arith.constant 0 : index
    %c0_2 = arith.constant 0 : index
    %c0_3 = arith.constant 0 : index
    %c0_4 = arith.constant 0 : index
    %1 = vector.load %arg2[%c0_1, %c0_2, %c0_3, %c0_4] : memref<1x1x108x1024xf32, #tpu.memory_space<vmem>>, vector<1x1x108x1024xf32>
    %2 = vector.shape_cast %1 : vector<1x1x108x1024xf32> to vector<108x1024xf32>
    %cst = arith.constant dense<0.000000e+00> : vector<16x1024xf32>
    %3 = tpu.matmul %0, %2, %cst {dimension_numbers = #tpu.dot_dimension_numbers<[1], [0], [0], [1], [0, 0, 1, 1], [], []>} : vector<16x108xf32>, vector<108x1024xf32>, vector<16x1024xf32> -> vector<16x1024xf32>
    %c0_5 = arith.constant 0 : index
    %c0_6 = arith.constant 0 : index
    %4 = vector.load %arg4[%c0_5, %c0_6] : memref<16x1xf32, #tpu.memory_space<vmem>>, vector<16x1xf32>
    %5 = vector.broadcast %4 : vector<16x1xf32> to vector<16x1024xf32>
    %6 = arith.addf %3, %5 : vector<16x1024xf32>
    %7 = vector.extract_strided_slice %6 {offsets = [0, 0], sizes = [16, 128], strides = [1, 1]} : vector<16x1024xf32> to vector<16x128xf32>
    %8 = vector.extract_strided_slice %7 {offsets = [0, 0], sizes = [8, 128], strides = [1, 1]} : vector<16x128xf32> to vector<8x128xf32>
    %9 = math.tanh %8 : vector<8x128xf32>
    %c0_7 = arith.constant 0 : index
    %c0_8 = arith.constant 0 : index
    %c0_9 = arith.constant 0 : index
    %10 = vector.load %arg6[%c0_7, %c0_8, %c0_9] : memref<8x8x128xf32, #tpu.memory_space<vmem>>, vector<1x8x128xf32>
    %11 = vector.shape_cast %10 : vector<1x8x128xf32> to vector<8x128xf32>
    %12 = vector.shape_cast %9 : vector<8x128xf32> to vector<1x8x128xf32>
    tpu.vector_store %arg6[%c0_7, %c0_8, %c0_9], %12 {strides = array<i32>} : memref<8x8x128xf32, #tpu.memory_space<vmem>>, vector<1x8x128xf32>,
    %13 = vector.extract_strided_slice %7 {offsets = [8, 0], sizes = [8, 128], strides = [1, 1]} : vector<16x128xf32> to vector<8x128xf32>
    %14 = arith.negf %13 : vector<8x128xf32>
    %15 = math.exp %14 : vector<8x128xf32>
    %cst_10 = arith.constant 1.000000e+00 : f32
    %16 = vector.broadcast %cst_10 : f32 to vector<8x128xf32>
    %17 = arith.addf %16, %15 : vector<8x128xf32>
    %18 = arith.divf %16, %17 : vector<8x128xf32>
    %c0_11 = arith.constant 0 : index
    %c0_12 = arith.constant 0 : index
    %c0_13 = arith.constant 0 : index
    %19 = vector.load %arg7[%c0_11, %c0_12, %c0_13] : memref<8x8x128xf32, #tpu.memory_space<vmem>>, vector<1x8x128xf32>
    %20 = vector.shape_cast %19 : vector<1x8x128xf32> to vector<8x128xf32>
    %21 = vector.shape_cast %18 : vector<8x128xf32> to vector<1x8x128xf32>
    tpu.vector_store %arg7[%c0_11, %c0_12, %c0_13], %21 {strides = array<i32>} : memref<8x8x128xf32, #tpu.memory_space<vmem>>, vector<1x8x128xf32>,
    %22 = vector.extract_strided_slice %6 {offsets = [0, 128], sizes = [16, 128], strides = [1, 1]} : vector<16x1024xf32> to vector<16x128xf32>
    %23 = vector.extract_strided_slice %22 {offsets = [0, 0], sizes = [8, 128], strides = [1, 1]} : vector<16x128xf32> to vector<8x128xf32>
    %24 = math.tanh %23 : vector<8x128xf32>
    %c1 = arith.constant 1 : index
    %c0_14 = arith.constant 0 : index
    %c0_15 = arith.constant 0 : index
    %25 = vector.load %arg6[%c1, %c0_14, %c0_15] : memref<8x8x128xf32, #tpu.memory_space<vmem>>, vector<1x8x128xf32>
    %26 = vector.shape_cast %25 : vector<1x8x128xf32> to vector<8x128xf32>
    %27 = vector.shape_cast %24 : vector<8x128xf32> to vector<1x8x128xf32>
    tpu.vector_store %arg6[%c1, %c0_14, %c0_15], %27 {strides = array<i32>} : memref<8x8x128xf32, #tpu.memory_space<vmem>>, vector<1x8x128xf32>,
    %28 = vector.extract_strided_slice %22 {offsets = [8, 0], sizes = [8, 128], strides = [1, 1]} : vector<16x128xf32> to vector<8x128xf32>
    %29 = arith.negf %28 : vector<8x128xf32>
    %30 = math.exp %29 : vector<8x128xf32>
    %cst_16 = arith.constant 1.000000e+00 : f32
    %31 = vector.broadcast %cst_16 : f32 to vector<8x128xf32>
    %32 = arith.addf %31, %30 : vector<8x128xf32>
    %33 = arith.divf %31, %32 : vector<8x128xf32>
    %c1_17 = arith.constant 1 : index
    %c0_18 = arith.constant 0 : index
    %c0_19 = arith.constant 0 : index
    %34 = vector.load %arg7[%c1_17, %c0_18, %c0_19] : memref<8x8x128xf32, #tpu.memory_space<vmem>>, vector<1x8x128xf32>
    %35 = vector.shape_cast %34 : vector<1x8x128xf32> to vector<8x128xf32>
    %36 = vector.shape_cast %33 : vector<8x128xf32> to vector<1x8x128xf32>
    tpu.vector_store %arg7[%c1_17, %c0_18, %c0_19], %36 {strides = array<i32>} : memref<8x8x128xf32, #tpu.memory_space<vmem>>, vector<1x8x128xf32>,
    %37 = vector.extract_strided_slice %6 {offsets = [0, 256], sizes = [16, 128], strides = [1, 1]} : vector<16x1024xf32> to vector<16x128xf32>
    %38 = vector.extract_strided_slice %37 {offsets = [0, 0], sizes = [8, 128], strides = [1, 1]} : vector<16x128xf32> to vector<8x128xf32>
    %39 = math.tanh %38 : vector<8x128xf32>
    %c2 = arith.constant 2 : index
    %c0_20 = arith.constant 0 : index
    %c0_21 = arith.constant 0 : index
    %40 = vector.load %arg6[%c2, %c0_20, %c0_21] : memref<8x8x128xf32, #tpu.memory_space<vmem>>, vector<1x8x128xf32>
    %41 = vector.shape_cast %40 : vector<1x8x128xf32> to vector<8x128xf32>
    %42 = vector.shape_cast %39 : vector<8x128xf32> to vector<1x8x128xf32>
    tpu.vector_store %arg6[%c2, %c0_20, %c0_21], %42 {strides = array<i32>} : memref<8x8x128xf32, #tpu.memory_space<vmem>>, vector<1x8x128xf32>,
    %43 = vector.extract_strided_slice %37 {offsets = [8, 0], sizes = [8, 128], strides = [1, 1]} : vector<16x128xf32> to vector<8x128xf32>
    %44 = arith.negf %43 : vector<8x128xf32>
    %45 = math.exp %44 : vector<8x128xf32>
    %cst_22 = arith.constant 1.000000e+00 : f32
    %46 = vector.broadcast %cst_22 : f32 to vector<8x128xf32>
    %47 = arith.addf %46, %45 : vector<8x128xf32>
    %48 = arith.divf %46, %47 : vector<8x128xf32>
    %c2_23 = arith.constant 2 : index
    %c0_24 = arith.constant 0 : index
    %c0_25 = arith.constant 0 : index
    %49 = vector.load %arg7[%c2_23, %c0_24, %c0_25] : memref<8x8x128xf32, #tpu.memory_space<vmem>>, vector<1x8x128xf32>
    %50 = vector.shape_cast %49 : vector<1x8x128xf32> to vector<8x128xf32>
    %51 = vector.shape_cast %48 : vector<8x128xf32> to vector<1x8x128xf32>
    tpu.vector_store %arg7[%c2_23, %c0_24, %c0_25], %51 {strides = array<i32>} : memref<8x8x128xf32, #tpu.memory_space<vmem>>, vector<1x8x128xf32>,
    %52 = vector.extract_strided_slice %6 {offsets = [0, 384], sizes = [16, 128], strides = [1, 1]} : vector<16x1024xf32> to vector<16x128xf32>
    %53 = vector.extract_strided_slice %52 {offsets = [0, 0], sizes = [8, 128], strides = [1, 1]} : vector<16x128xf32> to vector<8x128xf32>
    %54 = math.tanh %53 : vector<8x128xf32>
    %c3 = arith.constant 3 : index
    %c0_26 = arith.constant 0 : index
    %c0_27 = arith.constant 0 : index
    %55 = vector.load %arg6[%c3, %c0_26, %c0_27] : memref<8x8x128xf32, #tpu.memory_space<vmem>>, vector<1x8x128xf32>
    %56 = vector.shape_cast %55 : vector<1x8x128xf32> to vector<8x128xf32>
    %57 = vector.shape_cast %54 : vector<8x128xf32> to vector<1x8x128xf32>
    tpu.vector_store %arg6[%c3, %c0_26, %c0_27], %57 {strides = array<i32>} : memref<8x8x128xf32, #tpu.memory_space<vmem>>, vector<1x8x128xf32>,
    %58 = vector.extract_strided_slice %52 {offsets = [8, 0], sizes = [8, 128], strides = [1, 1]} : vector<16x128xf32> to vector<8x128xf32>
    %59 = arith.negf %58 : vector<8x128xf32>
    %60 = math.exp %59 : vector<8x128xf32>
    %cst_28 = arith.constant 1.000000e+00 : f32
    %61 = vector.broadcast %cst_28 : f32 to vector<8x128xf32>
    %62 = arith.addf %61, %60 : vector<8x128xf32>
    %63 = arith.divf %61, %62 : vector<8x128xf32>
    %c3_29 = arith.constant 3 : index
    %c0_30 = arith.constant 0 : index
    %c0_31 = arith.constant 0 : index
    %64 = vector.load %arg7[%c3_29, %c0_30, %c0_31] : memref<8x8x128xf32, #tpu.memory_space<vmem>>, vector<1x8x128xf32>
    %65 = vector.shape_cast %64 : vector<1x8x128xf32> to vector<8x128xf32>
    %66 = vector.shape_cast %63 : vector<8x128xf32> to vector<1x8x128xf32>
    tpu.vector_store %arg7[%c3_29, %c0_30, %c0_31], %66 {strides = array<i32>} : memref<8x8x128xf32, #tpu.memory_space<vmem>>, vector<1x8x128xf32>,
    %67 = vector.extract_strided_slice %6 {offsets = [0, 512], sizes = [16, 128], strides = [1, 1]} : vector<16x1024xf32> to vector<16x128xf32>
    %68 = vector.extract_strided_slice %67 {offsets = [0, 0], sizes = [8, 128], strides = [1, 1]} : vector<16x128xf32> to vector<8x128xf32>
    %69 = math.tanh %68 : vector<8x128xf32>
    %c4 = arith.constant 4 : index
    %c0_32 = arith.constant 0 : index
    %c0_33 = arith.constant 0 : index
    %70 = vector.load %arg6[%c4, %c0_32, %c0_33] : memref<8x8x128xf32, #tpu.memory_space<vmem>>, vector<1x8x128xf32>
    %71 = vector.shape_cast %70 : vector<1x8x128xf32> to vector<8x128xf32>
    %72 = vector.shape_cast %69 : vector<8x128xf32> to vector<1x8x128xf32>
    tpu.vector_store %arg6[%c4, %c0_32, %c0_33], %72 {strides = array<i32>} : memref<8x8x128xf32, #tpu.memory_space<vmem>>, vector<1x8x128xf32>,
    %73 = vector.extract_strided_slice %67 {offsets = [8, 0], sizes = [8, 128], strides = [1, 1]} : vector<16x128xf32> to vector<8x128xf32>
    %74 = arith.negf %73 : vector<8x128xf32>
    %75 = math.exp %74 : vector<8x128xf32>
    %cst_34 = arith.constant 1.000000e+00 : f32
    %76 = vector.broadcast %cst_34 : f32 to vector<8x128xf32>
    %77 = arith.addf %76, %75 : vector<8x128xf32>
    %78 = arith.divf %76, %77 : vector<8x128xf32>
    %c4_35 = arith.constant 4 : index
    %c0_36 = arith.constant 0 : index
    %c0_37 = arith.constant 0 : index
    %79 = vector.load %arg7[%c4_35, %c0_36, %c0_37] : memref<8x8x128xf32, #tpu.memory_space<vmem>>, vector<1x8x128xf32>
    %80 = vector.shape_cast %79 : vector<1x8x128xf32> to vector<8x128xf32>
    %81 = vector.shape_cast %78 : vector<8x128xf32> to vector<1x8x128xf32>
    tpu.vector_store %arg7[%c4_35, %c0_36, %c0_37], %81 {strides = array<i32>} : memref<8x8x128xf32, #tpu.memory_space<vmem>>, vector<1x8x128xf32>,
    %82 = vector.extract_strided_slice %6 {offsets = [0, 640], sizes = [16, 128], strides = [1, 1]} : vector<16x1024xf32> to vector<16x128xf32>
    %83 = vector.extract_strided_slice %82 {offsets = [0, 0], sizes = [8, 128], strides = [1, 1]} : vector<16x128xf32> to vector<8x128xf32>
    %84 = math.tanh %83 : vector<8x128xf32>
    %c5 = arith.constant 5 : index
    %c0_38 = arith.constant 0 : index
    %c0_39 = arith.constant 0 : index
    %85 = vector.load %arg6[%c5, %c0_38, %c0_39] : memref<8x8x128xf32, #tpu.memory_space<vmem>>, vector<1x8x128xf32>
    %86 = vector.shape_cast %85 : vector<1x8x128xf32> to vector<8x128xf32>
    %87 = vector.shape_cast %84 : vector<8x128xf32> to vector<1x8x128xf32>
    tpu.vector_store %arg6[%c5, %c0_38, %c0_39], %87 {strides = array<i32>} : memref<8x8x128xf32, #tpu.memory_space<vmem>>, vector<1x8x128xf32>,
    %88 = vector.extract_strided_slice %82 {offsets = [8, 0], sizes = [8, 128], strides = [1, 1]} : vector<16x128xf32> to vector<8x128xf32>
    %89 = arith.negf %88 : vector<8x128xf32>
    %90 = math.exp %89 : vector<8x128xf32>
    %cst_40 = arith.constant 1.000000e+00 : f32
    %91 = vector.broadcast %cst_40 : f32 to vector<8x128xf32>
    %92 = arith.addf %91, %90 : vector<8x128xf32>
    %93 = arith.divf %91, %92 : vector<8x128xf32>
    %c5_41 = arith.constant 5 : index
    %c0_42 = arith.constant 0 : index
    %c0_43 = arith.constant 0 : index
    %94 = vector.load %arg7[%c5_41, %c0_42, %c0_43] : memref<8x8x128xf32, #tpu.memory_space<vmem>>, vector<1x8x128xf32>
    %95 = vector.shape_cast %94 : vector<1x8x128xf32> to vector<8x128xf32>
    %96 = vector.shape_cast %93 : vector<8x128xf32> to vector<1x8x128xf32>
    tpu.vector_store %arg7[%c5_41, %c0_42, %c0_43], %96 {strides = array<i32>} : memref<8x8x128xf32, #tpu.memory_space<vmem>>, vector<1x8x128xf32>,
    %97 = vector.extract_strided_slice %6 {offsets = [0, 768], sizes = [16, 128], strides = [1, 1]} : vector<16x1024xf32> to vector<16x128xf32>
    %98 = vector.extract_strided_slice %97 {offsets = [0, 0], sizes = [8, 128], strides = [1, 1]} : vector<16x128xf32> to vector<8x128xf32>
    %99 = math.tanh %98 : vector<8x128xf32>
    %c6 = arith.constant 6 : index
    %c0_44 = arith.constant 0 : index
    %c0_45 = arith.constant 0 : index
    %100 = vector.load %arg6[%c6, %c0_44, %c0_45] : memref<8x8x128xf32, #tpu.memory_space<vmem>>, vector<1x8x128xf32>
    %101 = vector.shape_cast %100 : vector<1x8x128xf32> to vector<8x128xf32>
    %102 = vector.shape_cast %99 : vector<8x128xf32> to vector<1x8x128xf32>
    tpu.vector_store %arg6[%c6, %c0_44, %c0_45], %102 {strides = array<i32>} : memref<8x8x128xf32, #tpu.memory_space<vmem>>, vector<1x8x128xf32>,
    %103 = vector.extract_strided_slice %97 {offsets = [8, 0], sizes = [8, 128], strides = [1, 1]} : vector<16x128xf32> to vector<8x128xf32>
    %104 = arith.negf %103 : vector<8x128xf32>
    %105 = math.exp %104 : vector<8x128xf32>
    %cst_46 = arith.constant 1.000000e+00 : f32
    %106 = vector.broadcast %cst_46 : f32 to vector<8x128xf32>
    %107 = arith.addf %106, %105 : vector<8x128xf32>
    %108 = arith.divf %106, %107 : vector<8x128xf32>
    %c6_47 = arith.constant 6 : index
    %c0_48 = arith.constant 0 : index
    %c0_49 = arith.constant 0 : index
    %109 = vector.load %arg7[%c6_47, %c0_48, %c0_49] : memref<8x8x128xf32, #tpu.memory_space<vmem>>, vector<1x8x128xf32>
    %110 = vector.shape_cast %109 : vector<1x8x128xf32> to vector<8x128xf32>
    %111 = vector.shape_cast %108 : vector<8x128xf32> to vector<1x8x128xf32>
    tpu.vector_store %arg7[%c6_47, %c0_48, %c0_49], %111 {strides = array<i32>} : memref<8x8x128xf32, #tpu.memory_space<vmem>>, vector<1x8x128xf32>,
    %112 = vector.extract_strided_slice %6 {offsets = [0, 896], sizes = [16, 128], strides = [1, 1]} : vector<16x1024xf32> to vector<16x128xf32>
    %113 = vector.extract_strided_slice %112 {offsets = [0, 0], sizes = [8, 128], strides = [1, 1]} : vector<16x128xf32> to vector<8x128xf32>
    %114 = math.tanh %113 : vector<8x128xf32>
    %c7 = arith.constant 7 : index
    %c0_50 = arith.constant 0 : index
    %c0_51 = arith.constant 0 : index
    %115 = vector.load %arg6[%c7, %c0_50, %c0_51] : memref<8x8x128xf32, #tpu.memory_space<vmem>>, vector<1x8x128xf32>
    %116 = vector.shape_cast %115 : vector<1x8x128xf32> to vector<8x128xf32>
    %117 = vector.shape_cast %114 : vector<8x128xf32> to vector<1x8x128xf32>
    tpu.vector_store %arg6[%c7, %c0_50, %c0_51], %117 {strides = array<i32>} : memref<8x8x128xf32, #tpu.memory_space<vmem>>, vector<1x8x128xf32>,
    %118 = vector.extract_strided_slice %112 {offsets = [8, 0], sizes = [8, 128], strides = [1, 1]} : vector<16x128xf32> to vector<8x128xf32>
    %119 = arith.negf %118 : vector<8x128xf32>
    %120 = math.exp %119 : vector<8x128xf32>
    %cst_52 = arith.constant 1.000000e+00 : f32
    %121 = vector.broadcast %cst_52 : f32 to vector<8x128xf32>
    %122 = arith.addf %121, %120 : vector<8x128xf32>
    %123 = arith.divf %121, %122 : vector<8x128xf32>
    %c7_53 = arith.constant 7 : index
    %c0_54 = arith.constant 0 : index
    %c0_55 = arith.constant 0 : index
    %124 = vector.load %arg7[%c7_53, %c0_54, %c0_55] : memref<8x8x128xf32, #tpu.memory_space<vmem>>, vector<1x8x128xf32>
    %125 = vector.shape_cast %124 : vector<1x8x128xf32> to vector<8x128xf32>
    %126 = vector.shape_cast %123 : vector<8x128xf32> to vector<1x8x128xf32>
    tpu.vector_store %arg7[%c7_53, %c0_54, %c0_55], %126 {strides = array<i32>} : memref<8x8x128xf32, #tpu.memory_space<vmem>>, vector<1x8x128xf32>,
    %cst_56 = arith.constant 0.000000e+00 : f32
    %127 = vector.broadcast %cst_56 : f32 to vector<8x128xf32>
    %c0_i32 = arith.constant 0 : i32
    %128 = arith.index_cast %c0_i32 : i32 to index
    %c0_57 = arith.constant 0 : index
    %c0_58 = arith.constant 0 : index
    %129 = vector.load %arg7[%128, %c0_57, %c0_58] : memref<8x8x128xf32, #tpu.memory_space<vmem>>, vector<1x8x128xf32>
    %130 = vector.shape_cast %129 : vector<1x8x128xf32> to vector<8x128xf32>
    %131 = arith.mulf %130, %127 : vector<8x128xf32>
    %cst_59 = arith.constant 1.000000e+00 : f32
    %132 = vector.broadcast %cst_59 : f32 to vector<8x128xf32>
    %133 = arith.subf %132, %130 : vector<8x128xf32>
    %134 = arith.index_cast %c0_i32 : i32 to index
    %c0_60 = arith.constant 0 : index
    %c0_61 = arith.constant 0 : index
    %135 = vector.load %arg6[%134, %c0_60, %c0_61] : memref<8x8x128xf32, #tpu.memory_space<vmem>>, vector<1x8x128xf32>
    %136 = vector.shape_cast %135 : vector<1x8x128xf32> to vector<8x128xf32>
    %137 = arith.mulf %133, %136 : vector<8x128xf32>
    %138 = arith.addf %131, %137 : vector<8x128xf32>
    %c0_62 = arith.constant 0 : index
    %c0_63 = arith.constant 0 : index
    %139 = arith.index_cast %c0_i32 : i32 to index
    %c0_64 = arith.constant 0 : index
    %c0_65 = arith.constant 0 : index
    %140 = vector.load %arg5[%c0_62, %c0_63, %139, %c0_64, %c0_65] : memref<1x1x8x8x128xf32, #tpu.memory_space<vmem>>, vector<1x1x1x8x128xf32>
    %141 = vector.shape_cast %140 : vector<1x1x1x8x128xf32> to vector<8x128xf32>
    %142 = vector.shape_cast %138 : vector<8x128xf32> to vector<1x1x1x8x128xf32>
    tpu.vector_store %arg5[%c0_62, %c0_63, %139, %c0_64, %c0_65], %142 {strides = array<i32>} : memref<1x1x8x8x128xf32, #tpu.memory_space<vmem>>, vector<1x1x1x8x128xf32>,
    %c1_i32 = arith.constant 1 : i32
    %143 = arith.index_cast %c1_i32 : i32 to index
    %c0_66 = arith.constant 0 : index
    %c0_67 = arith.constant 0 : index
    %144 = vector.load %arg7[%143, %c0_66, %c0_67] : memref<8x8x128xf32, #tpu.memory_space<vmem>>, vector<1x8x128xf32>
    %145 = vector.shape_cast %144 : vector<1x8x128xf32> to vector<8x128xf32>
    %146 = arith.mulf %145, %138 : vector<8x128xf32>
    %cst_68 = arith.constant 1.000000e+00 : f32
    %147 = vector.broadcast %cst_68 : f32 to vector<8x128xf32>
    %148 = arith.subf %147, %145 : vector<8x128xf32>
    %149 = arith.index_cast %c1_i32 : i32 to index
    %c0_69 = arith.constant 0 : index
    %c0_70 = arith.constant 0 : index
    %150 = vector.load %arg6[%149, %c0_69, %c0_70] : memref<8x8x128xf32, #tpu.memory_space<vmem>>, vector<1x8x128xf32>
    %151 = vector.shape_cast %150 : vector<1x8x128xf32> to vector<8x128xf32>
    %152 = arith.mulf %148, %151 : vector<8x128xf32>
    %153 = arith.addf %146, %152 : vector<8x128xf32>
    %c0_71 = arith.constant 0 : index
    %c0_72 = arith.constant 0 : index
    %154 = arith.index_cast %c1_i32 : i32 to index
    %c0_73 = arith.constant 0 : index
    %c0_74 = arith.constant 0 : index
    %155 = vector.load %arg5[%c0_71, %c0_72, %154, %c0_73, %c0_74] : memref<1x1x8x8x128xf32, #tpu.memory_space<vmem>>, vector<1x1x1x8x128xf32>
    %156 = vector.shape_cast %155 : vector<1x1x1x8x128xf32> to vector<8x128xf32>
    %157 = vector.shape_cast %153 : vector<8x128xf32> to vector<1x1x1x8x128xf32>
    tpu.vector_store %arg5[%c0_71, %c0_72, %154, %c0_73, %c0_74], %157 {strides = array<i32>} : memref<1x1x8x8x128xf32, #tpu.memory_space<vmem>>, vector<1x1x1x8x128xf32>,
    %c2_i32 = arith.constant 2 : i32
    %158 = arith.index_cast %c2_i32 : i32 to index
    %c0_75 = arith.constant 0 : index
    %c0_76 = arith.constant 0 : index
    %159 = vector.load %arg7[%158, %c0_75, %c0_76] : memref<8x8x128xf32, #tpu.memory_space<vmem>>, vector<1x8x128xf32>
    %160 = vector.shape_cast %159 : vector<1x8x128xf32> to vector<8x128xf32>
    %161 = arith.mulf %160, %153 : vector<8x128xf32>
    %cst_77 = arith.constant 1.000000e+00 : f32
    %162 = vector.broadcast %cst_77 : f32 to vector<8x128xf32>
    %163 = arith.subf %162, %160 : vector<8x128xf32>
    %164 = arith.index_cast %c2_i32 : i32 to index
    %c0_78 = arith.constant 0 : index
    %c0_79 = arith.constant 0 : index
    %165 = vector.load %arg6[%164, %c0_78, %c0_79] : memref<8x8x128xf32, #tpu.memory_space<vmem>>, vector<1x8x128xf32>
    %166 = vector.shape_cast %165 : vector<1x8x128xf32> to vector<8x128xf32>
    %167 = arith.mulf %163, %166 : vector<8x128xf32>
    %168 = arith.addf %161, %167 : vector<8x128xf32>
    %c0_80 = arith.constant 0 : index
    %c0_81 = arith.constant 0 : index
    %169 = arith.index_cast %c2_i32 : i32 to index
    %c0_82 = arith.constant 0 : index
    %c0_83 = arith.constant 0 : index
    %170 = vector.load %arg5[%c0_80, %c0_81, %169, %c0_82, %c0_83] : memref<1x1x8x8x128xf32, #tpu.memory_space<vmem>>, vector<1x1x1x8x128xf32>
    %171 = vector.shape_cast %170 : vector<1x1x1x8x128xf32> to vector<8x128xf32>
    %172 = vector.shape_cast %168 : vector<8x128xf32> to vector<1x1x1x8x128xf32>
    tpu.vector_store %arg5[%c0_80, %c0_81, %169, %c0_82, %c0_83], %172 {strides = array<i32>} : memref<1x1x8x8x128xf32, #tpu.memory_space<vmem>>, vector<1x1x1x8x128xf32>,
    %c3_i32 = arith.constant 3 : i32
    %173 = arith.index_cast %c3_i32 : i32 to index
    %c0_84 = arith.constant 0 : index
    %c0_85 = arith.constant 0 : index
    %174 = vector.load %arg7[%173, %c0_84, %c0_85] : memref<8x8x128xf32, #tpu.memory_space<vmem>>, vector<1x8x128xf32>
    %175 = vector.shape_cast %174 : vector<1x8x128xf32> to vector<8x128xf32>
    %176 = arith.mulf %175, %168 : vector<8x128xf32>
    %cst_86 = arith.constant 1.000000e+00 : f32
    %177 = vector.broadcast %cst_86 : f32 to vector<8x128xf32>
    %178 = arith.subf %177, %175 : vector<8x128xf32>
    %179 = arith.index_cast %c3_i32 : i32 to index
    %c0_87 = arith.constant 0 : index
    %c0_88 = arith.constant 0 : index
    %180 = vector.load %arg6[%179, %c0_87, %c0_88] : memref<8x8x128xf32, #tpu.memory_space<vmem>>, vector<1x8x128xf32>
    %181 = vector.shape_cast %180 : vector<1x8x128xf32> to vector<8x128xf32>
    %182 = arith.mulf %178, %181 : vector<8x128xf32>
    %183 = arith.addf %176, %182 : vector<8x128xf32>
    %c0_89 = arith.constant 0 : index
    %c0_90 = arith.constant 0 : index
    %184 = arith.index_cast %c3_i32 : i32 to index
    %c0_91 = arith.constant 0 : index
    %c0_92 = arith.constant 0 : index
    %185 = vector.load %arg5[%c0_89, %c0_90, %184, %c0_91, %c0_92] : memref<1x1x8x8x128xf32, #tpu.memory_space<vmem>>, vector<1x1x1x8x128xf32>
    %186 = vector.shape_cast %185 : vector<1x1x1x8x128xf32> to vector<8x128xf32>
    %187 = vector.shape_cast %183 : vector<8x128xf32> to vector<1x1x1x8x128xf32>
    tpu.vector_store %arg5[%c0_89, %c0_90, %184, %c0_91, %c0_92], %187 {strides = array<i32>} : memref<1x1x8x8x128xf32, #tpu.memory_space<vmem>>, vector<1x1x1x8x128xf32>,
    %c4_i32 = arith.constant 4 : i32
    %188 = arith.index_cast %c4_i32 : i32 to index
    %c0_93 = arith.constant 0 : index
    %c0_94 = arith.constant 0 : index
    %189 = vector.load %arg7[%188, %c0_93, %c0_94] : memref<8x8x128xf32, #tpu.memory_space<vmem>>, vector<1x8x128xf32>
    %190 = vector.shape_cast %189 : vector<1x8x128xf32> to vector<8x128xf32>
    %191 = arith.mulf %190, %183 : vector<8x128xf32>
    %cst_95 = arith.constant 1.000000e+00 : f32
    %192 = vector.broadcast %cst_95 : f32 to vector<8x128xf32>
    %193 = arith.subf %192, %190 : vector<8x128xf32>
    %194 = arith.index_cast %c4_i32 : i32 to index
    %c0_96 = arith.constant 0 : index
    %c0_97 = arith.constant 0 : index
    %195 = vector.load %arg6[%194, %c0_96, %c0_97] : memref<8x8x128xf32, #tpu.memory_space<vmem>>, vector<1x8x128xf32>
    %196 = vector.shape_cast %195 : vector<1x8x128xf32> to vector<8x128xf32>
    %197 = arith.mulf %193, %196 : vector<8x128xf32>
    %198 = arith.addf %191, %197 : vector<8x128xf32>
    %c0_98 = arith.constant 0 : index
    %c0_99 = arith.constant 0 : index
    %199 = arith.index_cast %c4_i32 : i32 to index
    %c0_100 = arith.constant 0 : index
    %c0_101 = arith.constant 0 : index
    %200 = vector.load %arg5[%c0_98, %c0_99, %199, %c0_100, %c0_101] : memref<1x1x8x8x128xf32, #tpu.memory_space<vmem>>, vector<1x1x1x8x128xf32>
    %201 = vector.shape_cast %200 : vector<1x1x1x8x128xf32> to vector<8x128xf32>
    %202 = vector.shape_cast %198 : vector<8x128xf32> to vector<1x1x1x8x128xf32>
    tpu.vector_store %arg5[%c0_98, %c0_99, %199, %c0_100, %c0_101], %202 {strides = array<i32>} : memref<1x1x8x8x128xf32, #tpu.memory_space<vmem>>, vector<1x1x1x8x128xf32>,
    %c5_i32 = arith.constant 5 : i32
    %203 = arith.index_cast %c5_i32 : i32 to index
    %c0_102 = arith.constant 0 : index
    %c0_103 = arith.constant 0 : index
    %204 = vector.load %arg7[%203, %c0_102, %c0_103] : memref<8x8x128xf32, #tpu.memory_space<vmem>>, vector<1x8x128xf32>
    %205 = vector.shape_cast %204 : vector<1x8x128xf32> to vector<8x128xf32>
    %206 = arith.mulf %205, %198 : vector<8x128xf32>
    %cst_104 = arith.constant 1.000000e+00 : f32
    %207 = vector.broadcast %cst_104 : f32 to vector<8x128xf32>
    %208 = arith.subf %207, %205 : vector<8x128xf32>
    %209 = arith.index_cast %c5_i32 : i32 to index
    %c0_105 = arith.constant 0 : index
    %c0_106 = arith.constant 0 : index
    %210 = vector.load %arg6[%209, %c0_105, %c0_106] : memref<8x8x128xf32, #tpu.memory_space<vmem>>, vector<1x8x128xf32>
    %211 = vector.shape_cast %210 : vector<1x8x128xf32> to vector<8x128xf32>
    %212 = arith.mulf %208, %211 : vector<8x128xf32>
    %213 = arith.addf %206, %212 : vector<8x128xf32>
    %c0_107 = arith.constant 0 : index
    %c0_108 = arith.constant 0 : index
    %214 = arith.index_cast %c5_i32 : i32 to index
    %c0_109 = arith.constant 0 : index
    %c0_110 = arith.constant 0 : index
    %215 = vector.load %arg5[%c0_107, %c0_108, %214, %c0_109, %c0_110] : memref<1x1x8x8x128xf32, #tpu.memory_space<vmem>>, vector<1x1x1x8x128xf32>
    %216 = vector.shape_cast %215 : vector<1x1x1x8x128xf32> to vector<8x128xf32>
    %217 = vector.shape_cast %213 : vector<8x128xf32> to vector<1x1x1x8x128xf32>
    tpu.vector_store %arg5[%c0_107, %c0_108, %214, %c0_109, %c0_110], %217 {strides = array<i32>} : memref<1x1x8x8x128xf32, #tpu.memory_space<vmem>>, vector<1x1x1x8x128xf32>,
    %c6_i32 = arith.constant 6 : i32
    %218 = arith.index_cast %c6_i32 : i32 to index
    %c0_111 = arith.constant 0 : index
    %c0_112 = arith.constant 0 : index
    %219 = vector.load %arg7[%218, %c0_111, %c0_112] : memref<8x8x128xf32, #tpu.memory_space<vmem>>, vector<1x8x128xf32>
    %220 = vector.shape_cast %219 : vector<1x8x128xf32> to vector<8x128xf32>
    %221 = arith.mulf %220, %213 : vector<8x128xf32>
    %cst_113 = arith.constant 1.000000e+00 : f32
    %222 = vector.broadcast %cst_113 : f32 to vector<8x128xf32>
    %223 = arith.subf %222, %220 : vector<8x128xf32>
    %224 = arith.index_cast %c6_i32 : i32 to index
    %c0_114 = arith.constant 0 : index
    %c0_115 = arith.constant 0 : index
    %225 = vector.load %arg6[%224, %c0_114, %c0_115] : memref<8x8x128xf32, #tpu.memory_space<vmem>>, vector<1x8x128xf32>
    %226 = vector.shape_cast %225 : vector<1x8x128xf32> to vector<8x128xf32>
    %227 = arith.mulf %223, %226 : vector<8x128xf32>
    %228 = arith.addf %221, %227 : vector<8x128xf32>
    %c0_116 = arith.constant 0 : index
    %c0_117 = arith.constant 0 : index
    %229 = arith.index_cast %c6_i32 : i32 to index
    %c0_118 = arith.constant 0 : index
    %c0_119 = arith.constant 0 : index
    %230 = vector.load %arg5[%c0_116, %c0_117, %229, %c0_118, %c0_119] : memref<1x1x8x8x128xf32, #tpu.memory_space<vmem>>, vector<1x1x1x8x128xf32>
    %231 = vector.shape_cast %230 : vector<1x1x1x8x128xf32> to vector<8x128xf32>
    %232 = vector.shape_cast %228 : vector<8x128xf32> to vector<1x1x1x8x128xf32>
    tpu.vector_store %arg5[%c0_116, %c0_117, %229, %c0_118, %c0_119], %232 {strides = array<i32>} : memref<1x1x8x8x128xf32, #tpu.memory_space<vmem>>, vector<1x1x1x8x128xf32>,
    %c7_i32 = arith.constant 7 : i32
    %233 = arith.index_cast %c7_i32 : i32 to index
    %c0_120 = arith.constant 0 : index
    %c0_121 = arith.constant 0 : index
    %234 = vector.load %arg7[%233, %c0_120, %c0_121] : memref<8x8x128xf32, #tpu.memory_space<vmem>>, vector<1x8x128xf32>
    %235 = vector.shape_cast %234 : vector<1x8x128xf32> to vector<8x128xf32>
    %236 = arith.mulf %235, %228 : vector<8x128xf32>
    %cst_122 = arith.constant 1.000000e+00 : f32
    %237 = vector.broadcast %cst_122 : f32 to vector<8x128xf32>
    %238 = arith.subf %237, %235 : vector<8x128xf32>
    %239 = arith.index_cast %c7_i32 : i32 to index
    %c0_123 = arith.constant 0 : index
    %c0_124 = arith.constant 0 : index
    %240 = vector.load %arg6[%239, %c0_123, %c0_124] : memref<8x8x128xf32, #tpu.memory_space<vmem>>, vector<1x8x128xf32>
    %241 = vector.shape_cast %240 : vector<1x8x128xf32> to vector<8x128xf32>
    %242 = arith.mulf %238, %241 : vector<8x128xf32>
    %243 = arith.addf %236, %242 : vector<8x128xf32>
    %c0_125 = arith.constant 0 : index
    %c0_126 = arith.constant 0 : index
    %244 = arith.index_cast %c7_i32 : i32 to index
    %c0_127 = arith.constant 0 : index
    %c0_128 = arith.constant 0 : index
    %245 = vector.load %arg5[%c0_125, %c0_126, %244, %c0_127, %c0_128] : memref<1x1x8x8x128xf32, #tpu.memory_space<vmem>>, vector<1x1x1x8x128xf32>
    %246 = vector.shape_cast %245 : vector<1x1x1x8x128xf32> to vector<8x128xf32>
    %247 = vector.shape_cast %243 : vector<8x128xf32> to vector<1x1x1x8x128xf32>
    tpu.vector_store %arg5[%c0_125, %c0_126, %244, %c0_127, %c0_128], %247 {strides = array<i32>} : memref<1x1x8x8x128xf32, #tpu.memory_space<vmem>>, vector<1x1x1x8x128xf32>,
    %c8_i32 = arith.constant 8 : i32
    return
  }
  func.func @transform_0(%arg0: i32, %arg1: i32) -> (i32, i32, i32, i32) {
    %c0_i32 = arith.constant 0 : i32
    %c0_i32_0 = arith.constant 0 : i32
    %c0_i32_1 = arith.constant 0 : i32
    return %arg0, %arg1, %c0_i32, %c0_i32_0 : i32, i32, i32, i32
  }
  func.func @transform_1(%arg0: i32, %arg1: i32) -> (i32, i32) {
    %c0_i32 = arith.constant 0 : i32
    %c0_i32_0 = arith.constant 0 : i32
    %c0_i32_1 = arith.constant 0 : i32
    return %c0_i32, %c0_i32_0 : i32, i32
  }
  func.func @transform_2(%arg0: i32, %arg1: i32) -> (i32, i32) {
    %c0_i32 = arith.constant 0 : i32
    %c0_i32_0 = arith.constant 0 : i32
    %c0_i32_1 = arith.constant 0 : i32
    return %c0_i32, %c0_i32_0 : i32, i32
  }
  func.func @transform_3(%arg0: i32, %arg1: i32) -> (i32, i32, i32, i32, i32) {
    %c0_i32 = arith.constant 0 : i32
    %c0_i32_0 = arith.constant 0 : i32
    %c0_i32_1 = arith.constant 0 : i32
    %c0_i32_2 = arith.constant 0 : i32
    return %arg0, %arg1, %c0_i32, %c0_i32_0, %c0_i32_1 : i32, i32, i32, i32, i32
  }
}

</mosaic_0001>

<llo_original>
// kernel: tpu_custom_call.1
$region0: #{tpu_custom_call.1}
  #allocation0 [shape = 'u32[]', space=smem, size = 0x4, offset = 0x4, fixed_abs, tag = 'smem constant byte address 0x4 - core index']
  #allocation1 [shape = 'u32[144,128]{1,0:T(1,128)}', space=vmem, size = 0x12000, scoped, tag = 'internal scratch']
  #allocation2 [shape = 'f32[8,8,128]{2,1,0:T(8,128)}', space=vmem, size = 0x8000, scoped, tag = 'scratch operand']
  #allocation3 [shape = 'f32[8,8,128]{2,1,0:T(8,128)}', space=vmem, size = 0x8000, scoped, tag = 'scratch operand']
  %s0 = inlined_call_operand.vmem [shape: f32[2,2,108,1024], index: 0, kind: input, shape index: {}]
  %s1 = inlined_call_operand.vmem [shape: f32[16,108], index: 1, kind: input, shape index: {}]
  %s2 = inlined_call_operand.vmem [shape: f32[16,1], index: 2, kind: input, shape index: {}]
  %s3 = inlined_call_operand.hbm [shape: f32[2,2,8,8,128], index: 3, kind: output, shape index: {}]
  %s4 = sld [smem:[#allocation0]]
  $region45: #{tpu_custom_call.1} parent=0
    _
  %s6 = ssub.s32 1, %s4
  %s7 = scalar_select 0, %s6, %s4
  $region1: #{tpu_custom_call.1} parent=0
    #allocation4 [shape = 'u8[65536]{0}', space=vmem, size = 0x10000, scoped, tag = 'output window, operand 0']
    #allocation5 [shape = 's32[2]{0}', space=sflag, size = 0x8, scoped, tag = 'scoped memory for tpu_custom_call.1']
    %8 = vsyncpa [#allocation5], 0
    %s9 = scalar_lea.sflag [#allocation5], 1
    %10 = vsyncpa %s9, 0
    loop: start=0, step=1, limit=6
    $region2: #{tpu_custom_call.1} parent=1 // loop_pre_header
      _
    $region3: #{tpu_custom_call.1} parent=1 // loop_header
      %s12 = sphi 0, %s16
      %p13 = scmp.ge.s32.totalorder %s12, 6
      %s19 = sphi 0, %s31
      %s20 = sphi 0, %s27
      %s21 = sphi 0, %s19
      %s22 = sphi 0, %s20
      %s23 = sphi 0, %s21
      %s24 = sphi 0, %s22
      %s36 = sphi 0, %s38
      %s39 = sphi 0, %s36
      %s40 = sphi 0, %s39
      %s56 = sphi 0, %s40
      %s60 = sphi 0, %s60
      %s62 = sphi 0, %s60
      %s63 = sphi 0, %s62
      %s77 = sphi 0, %s63
      %s81 = sphi 0, %s81
      %s83 = sphi 0, %s81
      %s84 = sphi 0, %s83
      %s98 = sphi 0, %s84
      %s106 = sphi 0, %s108
      %s109 = sphi 0, %s106
      %s110 = sphi 0, %s109
      %s126 = sphi 0, %s110
    $region4: #{tpu_custom_call.1} parent=1 // loop_header_branch
      %15 = sbr.rel (%p13) target = $region8
    $region5: #{tpu_custom_call.1} parent=1 // loop_body
      %s17 = ssub.s32 %s12, 1
      %s18 = ssub.s32 %s12, 2
      %s25 = sadd.s32 1, %s20
      %p26 = scmp.ge.s32.totalorder %s25, 2
      %s27 = scalar_select %p26, 0, %s25
      %s28 = sadd.s32 1, %s19
      %s29 = scalar_select %p26, %s28, %s19
      %p30 = scmp.ge.s32.totalorder %s29, 2
      %s31 = scalar_select %p30, 0, %s29
      %s32 = ssub.s32 %s19, %s31
      %s33 = ssub.s32 %s20, %s27
      %s34 = sor.u32 %s32, %s33
      %p35 = scmp.eq.s32.totalorder %s34, 0
      %s37 = sadd.s32 %s36, 1
      %s38 = scalar_select %p35, %s36, %s37
      %p41 = pneg %p35
      %p42 = scmp.eq.s32.totalorder %s12, 3
      %p43 = por %p41, %p42
      %p44 = scmp.ne.s32.totalorder %s36, %s39
      %p45 = scmp.eq.s32.totalorder %s12, 0
      %p46 = por %p44, %p45
      %p47 = scmp.ne.s32.totalorder %s36, %s39
      %p48 = scmp.eq.s32.totalorder %s17, 3
      %p49 = por %p47, %p48
      %p50 = scmp.ne.s32.totalorder %s39, %s40
      %p51 = scmp.eq.s32.totalorder %s17, 0
      %p52 = por %p50, %p51
      %p53 = scmp.ne.s32.totalorder %s39, %s40
      %p54 = scmp.eq.s32.totalorder %s18, 3
      %p55 = por %p53, %p54
      %p57 = scmp.ne.s32.totalorder %s40, %s56
      %p58 = scmp.eq.s32.totalorder %s18, 0
      %p59 = por %p57, %p58
      %s61 = sadd.s32 %s60, 1
      %p64 = scmp.eq.s32.totalorder %s12, 3
      %p65 = scmp.ne.s32.totalorder %s60, %s62
      %p66 = scmp.eq.s32.totalorder %s12, 0
      %p67 = por %p65, %p66
      %p68 = scmp.ne.s32.totalorder %s60, %s62
      %p69 = scmp.eq.s32.totalorder %s17, 3
      %p70 = por %p68, %p69
      %p71 = scmp.ne.s32.totalorder %s62, %s63
      %p72 = scmp.eq.s32.totalorder %s17, 0
      %p73 = por %p71, %p72
      %p74 = scmp.ne.s32.totalorder %s62, %s63
      %p75 = scmp.eq.s32.totalorder %s18, 3
      %p76 = por %p74, %p75
      %p78 = scmp.ne.s32.totalorder %s63, %s77
      %p79 = scmp.eq.s32.totalorder %s18, 0
      %p80 = por %p78, %p79
      %s82 = sadd.s32 %s81, 1
      %p85 = scmp.eq.s32.totalorder %s12, 3
      %p86 = scmp.ne.s32.totalorder %s81, %s83
      %p87 = scmp.eq.s32.totalorder %s12, 0
      %p88 = por %p86, %p87
      %p89 = scmp.ne.s32.totalorder %s81, %s83
      %p90 = scmp.eq.s32.totalorder %s17, 3
      %p91 = por %p89, %p90
      %p92 = scmp.ne.s32.totalorder %s83, %s84
      %p93 = scmp.eq.s32.totalorder %s17, 0
      %p94 = por %p92, %p93
      %p95 = scmp.ne.s32.totalorder %s83, %s84
      %p96 = scmp.eq.s32.totalorder %s18, 3
      %p97 = por %p95, %p96
      %p99 = scmp.ne.s32.totalorder %s84, %s98
      %p100 = scmp.eq.s32.totalorder %s18, 0
      %p101 = por %p99, %p100
      %s102 = ssub.s32 %s19, %s31
      %s103 = ssub.s32 %s20, %s27
      %s104 = sor.u32 %s102, %s103
      %p105 = scmp.eq.s32.totalorder %s104, 0
      %s107 = sadd.s32 %s106, 1
      %s108 = scalar_select %p105, %s106, %s107
      %p111 = pneg %p105
      %p112 = scmp.eq.s32.totalorder %s12, 3
      %p113 = por %p111, %p112
      %p114 = scmp.ne.s32.totalorder %s106, %s109
      %p115 = scmp.eq.s32.totalorder %s12, 0
      %p116 = por %p114, %p115
      %p117 = scmp.ne.s32.totalorder %s106, %s109
      %p118 = scmp.eq.s32.totalorder %s17, 3
      %p119 = por %p117, %p118
      %p120 = scmp.ne.s32.totalorder %s109, %s110
      %p121 = scmp.eq.s32.totalorder %s17, 0
      %p122 = por %p120, %p121
      %p123 = scmp.ne.s32.totalorder %s109, %s110
      %p124 = scmp.eq.s32.totalorder %s18, 3
      %p125 = por %p123, %p124
      %p127 = scmp.ne.s32.totalorder %s110, %s126
      %p128 = scmp.eq.s32.totalorder %s18, 0
      %p129 = por %p127, %p128
      %p130 = scmp.le.s32.totalorder 1, %s12
      %p131 = scmp.lt.s32.totalorder %s12, 5
      %p132 = pnand %p130, %p131
      %p133 = pneg %p132
      // Predicated region
      $region9: #{tpu_custom_call.1} parent=5 // pred_check
        _
      $region10: #{tpu_custom_call.1} parent=5 // pred_check_branch
        %135 = sbr.rel (%p132) target = $region12
      $region11: #{tpu_custom_call.1} parent=5 // pred_region
        %s136 = ssub.s32 %s12, 1
        // Predicated region
        $region13: #{tpu_custom_call.1} parent=11 // pred_check
          %p137 = pneg %p73
        $region14: #{tpu_custom_call.1} parent=11 // pred_check_branch
          %139 = sbr.rel (%p137) target = $region16
        $region15: #{tpu_custom_call.1} parent=11 // pred_region
          _
        $region16: #{tpu_custom_call.1} parent=11 // pred_fallthru
          _
        // Predicated region
        $region17: #{tpu_custom_call.1} parent=11 // pred_check
          %p140 = pneg %p94
        $region18: #{tpu_custom_call.1} parent=11 // pred_check_branch
          %142 = sbr.rel (%p140) target = $region20
        $region19: #{tpu_custom_call.1} parent=11 // pred_region
          _
        $region20: #{tpu_custom_call.1} parent=11 // pred_fallthru
          _
      $region12: #{tpu_custom_call.1} parent=5 // pred_fallthru
        _
      %p143 = scmp.lt.s32.totalorder %s12, 4
      // Predicated region
      $region21: #{tpu_custom_call.1} parent=5 // pred_check
        %p144 = pneg %p143
      $region22: #{tpu_custom_call.1} parent=5 // pred_check_branch
        %146 = sbr.rel (%p144) target = $region24
      $region23: #{tpu_custom_call.1} parent=5 // pred_region
        // Predicated region
        $region25: #{tpu_custom_call.1} parent=23 // pred_check
          %p147 = pneg %p46
        $region26: #{tpu_custom_call.1} parent=23 // pred_check_branch
          %149 = sbr.rel (%p147) target = $region28
        $region27: #{tpu_custom_call.1} parent=23 // pred_region
          %p150 = scmp.lt.s32.totalorder %s19, 1
          %s151 = scalar_select %p150, %s19, 1
          %p152 = scmp.lt.s32.totalorder %s20, 1
          %s153 = scalar_select %p152, %s20, 1
          %s154 = smul.addr %s153, 112
          %s155 = smul.addr %s151, 224
          %s156 = sadd.s32 %s154, %s155
          %s157 = smul.addr %s156, 8
          %s158 = scalar_lea.vmem %s0, %s157
        $region28: #{tpu_custom_call.1} parent=23 // pred_fallthru
          _
      $region24: #{tpu_custom_call.1} parent=5 // pred_fallthru
        _
      %p159 = scmp.le.s32.totalorder 1, %s12
      %p160 = scmp.lt.s32.totalorder %s12, 5
      %p161 = pnand %p159, %p160
      %p162 = pneg %p161
      // Predicated region
      $region29: #{tpu_custom_call.1} parent=5 // pred_check
        _
      $region30: #{tpu_custom_call.1} parent=5 // pred_check_branch
        %164 = sbr.rel (%p161) target = $region32
      $region31: #{tpu_custom_call.1} parent=5 // pred_region
        %s165 = ssub.s32 %s12, 1
        %p166 = scmp.lt.s32.totalorder %s21, 1
        %s167 = scalar_select %p166, %s21, 1
        %p168 = scmp.lt.s32.totalorder %s22, 1
        %s169 = scalar_select %p168, %s22, 1
        %s170 = smul.addr %s169, 112
        %s171 = smul.addr %s167, 224
        %s172 = sadd.s32 %s170, %s171
        %s173 = smul.addr %s172, 8
        %s174 = scalar_lea.vmem %s0, %s173
        %p175 = pneg %p52
        %p176 = pneg %p49
        %p177 = pneg %p73
        %p178 = pneg %p70
        %p179 = pneg %p94
        %p180 = pneg %p91
        %p181 = pneg %p122
        %p182 = pneg %p119
        %s183 = sand.u32 %s109, 1
        %s184 = scalar_lea.sflag [#allocation5], %s183
        %s185 = sand.u32 %s109, 1
        %s186 = smul.addr %s185, 64
        %s187 = scalar_lea.vmem [#allocation4], %s186
        %p188 = scmp.lt.s32.totalorder %s21, 1
        %s189 = scalar_select %p188, %s21, 1
        %p190 = scmp.lt.s32.totalorder %s22, 1
        %s191 = scalar_select %p190, %s22, 1
        %s192 = smul.addr %s191, 112
        %s193 = smul.addr %s189, 224
        %s194 = sadd.s32 %s192, %s193
        %s195 = smul.addr %s194, 8
        %s196 = scalar_lea.vmem %s0, %s195
        %v197 = vld [vmem:[%s1] sm:$0xff]
        %v198 = vld [vmem:[%s1 + $0x8] sm:$0xff]
        %v199 = vld [vmem:[%s196] sm:$0xff]
        %v200 = vld [vmem:[%s196 + $0x8] sm:$0xff]
        %v201 = vld [vmem:[%s196 + $0x10] sm:$0xff]
        %v202 = vld [vmem:[%s196 + $0x18] sm:$0xff]
        %v203 = vld [vmem:[%s196 + $0x20] sm:$0xff]
        %v204 = vld [vmem:[%s196 + $0x28] sm:$0xff]
        %v205 = vld [vmem:[%s196 + $0x30] sm:$0xff]
        %v206 = vld [vmem:[%s196 + $0x38] sm:$0xff]
        %v207 = vld [vmem:[%s196 + $0x40] sm:$0xff]
        %v208 = vld [vmem:[%s196 + $0x48] sm:$0xff]
        %v209 = vld [vmem:[%s196 + $0x50] sm:$0xff]
        %v210 = vld [vmem:[%s196 + $0x58] sm:$0xff]
        %v211 = vld [vmem:[%s196 + $0x60] sm:$0xff]
        %v212 = vld [vmem:[%s196 + $0x68] sm:$0xff]
        %v213 = vld [vmem:[%s196 + $0x70] sm:$0xff]
        %v214 = vld [vmem:[%s196 + $0x78] sm:$0xff]
        %v215 = vld [vmem:[%s196 + $0x80] sm:$0xff]
        %v216 = vld [vmem:[%s196 + $0x88] sm:$0xff]
        %v217 = vld [vmem:[%s196 + $0x90] sm:$0xff]
        %v218 = vld [vmem:[%s196 + $0x98] sm:$0xff]
        %v219 = vld [vmem:[%s196 + $0xa0] sm:$0xff]
        %v220 = vld [vmem:[%s196 + $0xa8] sm:$0xff]
        %v221 = vld [vmem:[%s196 + $0xb0] sm:$0xff]
        %v222 = vld [vmem:[%s196 + $0xb8] sm:$0xff]
        %v223 = vld [vmem:[%s196 + $0xc0] sm:$0xff]
        %v224 = vld [vmem:[%s196 + $0xc8] sm:$0xff]
        %v225 = vld [vmem:[%s196 + $0xd0] sm:$0xff]
        %v226 = vld [vmem:[%s196 + $0xd8] sm:$0xff]
        %v227 = vld [vmem:[%s196 + $0xe0] sm:$0xff]
        %v228 = vld [vmem:[%s196 + $0xe8] sm:$0xff]
        %v229 = vld [vmem:[%s196 + $0xf0] sm:$0xff]
        %v230 = vld [vmem:[%s196 + $0xf8] sm:$0xff]
        %v231 = vld [vmem:[%s196 + $0x100] sm:$0xff]
        %v232 = vld [vmem:[%s196 + $0x108] sm:$0xff]
        %v233 = vld [vmem:[%s196 + $0x110] sm:$0xff]
        %v234 = vld [vmem:[%s196 + $0x118] sm:$0xff]
        %v235 = vld [vmem:[%s196 + $0x120] sm:$0xff]
        %v236 = vld [vmem:[%s196 + $0x128] sm:$0xff]
        %v237 = vld [vmem:[%s196 + $0x130] sm:$0xff]
        %v238 = vld [vmem:[%s196 + $0x138] sm:$0xff]
        %v239 = vld [vmem:[%s196 + $0x140] sm:$0xff]
        %v240 = vld [vmem:[%s196 + $0x148] sm:$0xff]
        %v241 = vld [vmem:[%s196 + $0x150] sm:$0xff]
        %v242 = vld [vmem:[%s196 + $0x158] sm:$0xff]
        %v243 = vld [vmem:[%s196 + $0x160] sm:$0xff]
        %v244 = vld [vmem:[%s196 + $0x168] sm:$0xff]
        %v245 = vld [vmem:[%s196 + $0x170] sm:$0xff]
        %v246 = vld [vmem:[%s196 + $0x178] sm:$0xff]
        %v247 = vld [vmem:[%s196 + $0x180] sm:$0xff]
        %v248 = vld [vmem:[%s196 + $0x188] sm:$0xff]
        %v249 = vld [vmem:[%s196 + $0x190] sm:$0xff]
        %v250 = vld [vmem:[%s196 + $0x198] sm:$0xff]
        %v251 = vld [vmem:[%s196 + $0x1a0] sm:$0xff]
        %v252 = vld [vmem:[%s196 + $0x1a8] sm:$0xff]
        %v253 = vld [vmem:[%s196 + $0x1b0] sm:$0xff]
        %v254 = vld [vmem:[%s196 + $0x1b8] sm:$0xff]
        %v255 = vld [vmem:[%s196 + $0x1c0] sm:$0xff]
        %v256 = vld [vmem:[%s196 + $0x1c8] sm:$0xff]
        %v257 = vld [vmem:[%s196 + $0x1d0] sm:$0xff]
        %v258 = vld [vmem:[%s196 + $0x1d8] sm:$0xff]
        %v259 = vld [vmem:[%s196 + $0x1e0] sm:$0xff]
        %v260 = vld [vmem:[%s196 + $0x1e8] sm:$0xff]
        %v261 = vld [vmem:[%s196 + $0x1f0] sm:$0xff]
        %v262 = vld [vmem:[%s196 + $0x1f8] sm:$0xff]
        %v263 = vld [vmem:[%s196 + $0x200] sm:$0xff]
        %v264 = vld [vmem:[%s196 + $0x208] sm:$0xff]
        %v265 = vld [vmem:[%s196 + $0x210] sm:$0xff]
        %v266 = vld [vmem:[%s196 + $0x218] sm:$0xff]
        %v267 = vld [vmem:[%s196 + $0x220] sm:$0xff]
        %v268 = vld [vmem:[%s196 + $0x228] sm:$0xff]
        %v269 = vld [vmem:[%s196 + $0x230] sm:$0xff]
        %v270 = vld [vmem:[%s196 + $0x238] sm:$0xff]
        %v271 = vld [vmem:[%s196 + $0x240] sm:$0xff]
        %v272 = vld [vmem:[%s196 + $0x248] sm:$0xff]
        %v273 = vld [vmem:[%s196 + $0x250] sm:$0xff]
        %v274 = vld [vmem:[%s196 + $0x258] sm:$0xff]
        %v275 = vld [vmem:[%s196 + $0x260] sm:$0xff]
        %v276 = vld [vmem:[%s196 + $0x268] sm:$0xff]
        %v277 = vld [vmem:[%s196 + $0x270] sm:$0xff]
        %v278 = vld [vmem:[%s196 + $0x278] sm:$0xff]
        %v279 = vld [vmem:[%s196 + $0x280] sm:$0xff]
        %v280 = vld [vmem:[%s196 + $0x288] sm:$0xff]
        %v281 = vld [vmem:[%s196 + $0x290] sm:$0xff]
        %v282 = vld [vmem:[%s196 + $0x298] sm:$0xff]
        %v283 = vld [vmem:[%s196 + $0x2a0] sm:$0xff]
        %v284 = vld [vmem:[%s196 + $0x2a8] sm:$0xff]
        %v285 = vld [vmem:[%s196 + $0x2b0] sm:$0xff]
        %v286 = vld [vmem:[%s196 + $0x2b8] sm:$0xff]
        %v287 = vld [vmem:[%s196 + $0x2c0] sm:$0xff]
        %v288 = vld [vmem:[%s196 + $0x2c8] sm:$0xff]
        %v289 = vld [vmem:[%s196 + $0x2d0] sm:$0xff]
        %v290 = vld [vmem:[%s196 + $0x2d8] sm:$0xff]
        %v291 = vld [vmem:[%s196 + $0x2e0] sm:$0xff]
        %v292 = vld [vmem:[%s196 + $0x2e8] sm:$0xff]
        %v293 = vld [vmem:[%s196 + $0x2f0] sm:$0xff]
        %v294 = vld [vmem:[%s196 + $0x2f8] sm:$0xff]
        %v295 = vld [vmem:[%s196 + $0x300] sm:$0xff]
        %v296 = vld [vmem:[%s196 + $0x308] sm:$0xff]
        %v297 = vld [vmem:[%s196 + $0x310] sm:$0xff]
        %v298 = vld [vmem:[%s196 + $0x318] sm:$0xff]
        %v299 = vld [vmem:[%s196 + $0x320] sm:$0xff]
        %v300 = vld [vmem:[%s196 + $0x328] sm:$0xff]
        %v301 = vld [vmem:[%s196 + $0x330] sm:$0xff]
        %v302 = vld [vmem:[%s196 + $0x338] sm:$0xff]
        %v303 = vld [vmem:[%s196 + $0x340] sm:$0xf]
        %v304 = vld [vmem:[%s196 + $0x348] sm:$0xf]
        %v305 = vld [vmem:[%s196 + $0x350] sm:$0xf]
        %v306 = vld [vmem:[%s196 + $0x358] sm:$0xf]
        %v307 = vld [vmem:[%s196 + $0x360] sm:$0xf]
        %v308 = vld [vmem:[%s196 + $0x368] sm:$0xf]
        %v309 = vld [vmem:[%s196 + $0x370] sm:$0xf]
        %v310 = vld [vmem:[%s196 + $0x378] sm:$0xf]
        %v311 = vld [vmem:[%s2] sm:$0xff]
        %v312 = vld [vmem:[%s2 + $0x8] sm:$0xff]
        %314 = vset.pattern.permute.xlu0 0
        %315 = vperm.xlu0 %314, %v311
        %v316 = vpop.permute.xlu0 %315
        %319 = vset.pattern.permute.xlu0 0
        %320 = vperm.xlu0 %319, %v312
        %v321 = vpop.permute.xlu0 %320
        %vm323 = vcmask 883712
        %v325 = vsel %vm323, %v197, 0
        %v328 = vsel %vm323, %v198, 0
        %vm330 = vcmask 1043456
        %v332 = vsel %vm330, %v303, 0
        %v335 = vsel %vm330, %v304, 0
        %v338 = vsel %vm330, %v305, 0
        %v341 = vsel %vm330, %v306, 0
        %v344 = vsel %vm330, %v307, 0
        %v347 = vsel %vm330, %v308, 0
        %v350 = vsel %vm330, %v309, 0
        %v353 = vsel %vm330, %v310, 0
        %355 = vmatprep.subr.mxu0 %v200
        %356 = vmatpush1.msra.mxu0 %v199
        %357 = vmatprep.subr.mxu0 %v208
        %358 = vmatpush1.msra.mxu0 %v207
        %359 = vmatprep.subr.mxu0 %v216
        %360 = vmatpush1.msra.mxu0 %v215
        %361 = vmatprep.subr.mxu0 %v224
        %362 = vmatpush1.msra.mxu0 %v223
        %363 = vmatprep.subr.mxu0 %v232
        %364 = vmatpush1.msra.mxu0 %v231
        %365 = vmatprep.subr.mxu0 %v240
        %366 = vmatpush1.msra.mxu0 %v239
        %367 = vmatprep.subr.mxu0 %v248
        %368 = vmatpush1.msra.mxu0 %v247
        %369 = vmatprep.subr.mxu0 %v256
        %370 = vmatpush1.msra.mxu0 %v255
        %371 = vmatprep.subr.mxu0 %v264
        %372 = vmatpush1.msra.mxu0 %v263
        %373 = vmatprep.subr.mxu0 %v272
        %374 = vmatpush1.msra.mxu0 %v271
        %375 = vmatprep.subr.mxu0 %v280
        %376 = vmatpush1.msra.mxu0 %v279
        %377 = vmatprep.subr.mxu0 %v288
        %378 = vmatpush1.msra.mxu0 %v287
        %379 = vmatprep.subr.mxu0 %v296
        %380 = vmatpush1.msra.mxu0 %v295
        %381 = vmatprep.subr.mxu0 %v335
        %382 = vmatpush1.msra.mxu0 %v332
        %383 = vmatprep.subr.mxu0 0.0
        %384 = vmatpush1.msra.mxu0 0.0
        %385 = vmatprep.subr.mxu0 0.0
        %386 = vmatpush1.msra.mxu0 0.0
        %387 = vmatprep.subr.mxu0 0.0
        %388 = vmatpush1.msra.mxu0 0.0
        %389 = vmatprep.subr.mxu0 0.0
        %390 = vmatpush1.msra.mxu0 0.0
        %391 = vmatprep.subr.mxu0 0.0
        %392 = vmatpush1.msra.mxu0 0.0
        %393 = vmatprep.subr.mxu0 0.0
        %394 = vmatpush1.msra.mxu0 0.0
        %395 = vmatprep.subr.mxu0 0.0
        %396 = vmatpush1.msra.mxu0 0.0
        %397 = vmatprep.subr.mxu0 0.0
        %398 = vmatpush1.msra.mxu0 0.0
        %399 = vmatprep.subr.mxu0 0.0
        %400 = vmatpush1.msra.mxu0 0.0
        %401 = vmatprep.subr.mxu0 0.0
        %402 = vmatpush1.msra.mxu0 0.0
        %403 = vmatprep.subr.mxu0 0.0
        %404 = vmatpush1.msra.mxu0 0.0
        %405 = vmatprep.subr.mxu0 0.0
        %406 = vmatpush1.msra.mxu0 0.0
        %407 = vmatprep.subr.mxu0 0.0
        %408 = vmatpush1.msra.mxu0 0.0
        %409 = vmatprep.subr.mxu0 0.0
        %410 = vmatpush1.msra.mxu0 0.0
        %411 = vmatprep.subr.mxu0 0.0
        %412 = vmatpush1.msra.mxu0 0.0
        %413 = vmatprep.subr.mxu0 0.0
        %414 = vmatpush1.msra.mxu0 0.0
        %415 = vmatprep.subr.mxu0 0.0
        %416 = vmatpush1.msra.mxu0 0.0
        %417 = vmatprep.subr.mxu0 0.0
        %418 = vmatpush1.msra.mxu0 0.0
        %419 = vmatprep.mubr.f32.mxu0 0.0
        %420 = vmatmul.mubr.f32.gmra.mrb[0].mxu0 %v325
        %v421 = vpop.f32.mrb[0].mxu0
        %v422 = vadd.f32 %v316, %v421
        %v423 = vpop.f32.mrb[0].mxu0
        %v424 = vadd.f32 %v316, %v423
        %425 = vmatprep.mubr.f32.mxu0 0.0
        %426 = vmatmul.mubr.f32.gmra.mrb[0].mxu0 %v328
        %v427 = vpop.f32.mrb[0].mxu0
        %v428 = vadd.f32 %v321, %v427
        %v429 = vpop.f32.mrb[0].mxu0
        %v430 = vadd.f32 %v321, %v429
        %431 = vdwg.mxu0
        %432 = vmatprep.subr.mxu0 %v202
        %433 = vmatpush1.msra.mxu0 %v201
        %434 = vmatprep.subr.mxu0 %v210
        %435 = vmatpush1.msra.mxu0 %v209
        %436 = vmatprep.subr.mxu0 %v218
        %437 = vmatpush1.msra.mxu0 %v217
        %438 = vmatprep.subr.mxu0 %v226
        %439 = vmatpush1.msra.mxu0 %v225
        %440 = vmatprep.subr.mxu0 %v234
        %441 = vmatpush1.msra.mxu0 %v233
        %442 = vmatprep.subr.mxu0 %v242
        %443 = vmatpush1.msra.mxu0 %v241
        %444 = vmatprep.subr.mxu0 %v250
        %445 = vmatpush1.msra.mxu0 %v249
        %446 = vmatprep.subr.mxu0 %v258
        %447 = vmatpush1.msra.mxu0 %v257
        %448 = vmatprep.subr.mxu0 %v266
        %449 = vmatpush1.msra.mxu0 %v265
        %450 = vmatprep.subr.mxu0 %v274
        %451 = vmatpush1.msra.mxu0 %v273
        %452 = vmatprep.subr.mxu0 %v282
        %453 = vmatpush1.msra.mxu0 %v281
        %454 = vmatprep.subr.mxu0 %v290
        %455 = vmatpush1.msra.mxu0 %v289
        %456 = vmatprep.subr.mxu0 %v298
        %457 = vmatpush1.msra.mxu0 %v297
        %458 = vmatprep.subr.mxu0 %v341
        %459 = vmatpush1.msra.mxu0 %v338
        %460 = vmatprep.subr.mxu0 0.0
        %461 = vmatpush1.msra.mxu0 0.0
        %462 = vmatprep.subr.mxu0 0.0
        %463 = vmatpush1.msra.mxu0 0.0
        %464 = vmatprep.subr.mxu0 0.0
        %465 = vmatpush1.msra.mxu0 0.0
        %466 = vmatprep.subr.mxu0 0.0
        %467 = vmatpush1.msra.mxu0 0.0
        %468 = vmatprep.subr.mxu0 0.0
        %469 = vmatpush1.msra.mxu0 0.0
        %470 = vmatprep.subr.mxu0 0.0
        %471 = vmatpush1.msra.mxu0 0.0
        %472 = vmatprep.subr.mxu0 0.0
        %473 = vmatpush1.msra.mxu0 0.0
        %474 = vmatprep.subr.mxu0 0.0
        %475 = vmatpush1.msra.mxu0 0.0
        %476 = vmatprep.subr.mxu0 0.0
        %477 = vmatpush1.msra.mxu0 0.0
        %478 = vmatprep.subr.mxu0 0.0
        %479 = vmatpush1.msra.mxu0 0.0
        %480 = vmatprep.subr.mxu0 0.0
        %481 = vmatpush1.msra.mxu0 0.0
        %482 = vmatprep.subr.mxu0 0.0
        %483 = vmatpush1.msra.mxu0 0.0
        %484 = vmatprep.subr.mxu0 0.0
        %485 = vmatpush1.msra.mxu0 0.0
        %486 = vmatprep.subr.mxu0 0.0
        %487 = vmatpush1.msra.mxu0 0.0
        %488 = vmatprep.subr.mxu0 0.0
        %489 = vmatpush1.msra.mxu0 0.0
        %490 = vmatprep.subr.mxu0 0.0
        %491 = vmatpush1.msra.mxu0 0.0
        %492 = vmatprep.subr.mxu0 0.0
        %493 = vmatpush1.msra.mxu0 0.0
        %494 = vmatprep.subr.mxu0 0.0
        %495 = vmatpush1.msra.mxu0 0.0
        %496 = vmatprep.mubr.f32.mxu0 0.0
        %497 = vmatmul.mubr.f32.gmra.mrb[0].mxu0 %v325
        %v498 = vpop.f32.mrb[0].mxu0
        %v499 = vadd.f32 %v316, %v498
        %v500 = vpop.f32.mrb[0].mxu0
        %v501 = vadd.f32 %v316, %v500
        %502 = vmatprep.mubr.f32.mxu0 0.0
        %503 = vmatmul.mubr.f32.gmra.mrb[0].mxu0 %v328
        %v504 = vpop.f32.mrb[0].mxu0
        %v505 = vadd.f32 %v321, %v504
        %v506 = vpop.f32.mrb[0].mxu0
        %v507 = vadd.f32 %v321, %v506
        %508 = vdwg.mxu0
        %509 = vmatprep.subr.mxu0 %v204
        %510 = vmatpush1.msra.mxu0 %v203
        %511 = vmatprep.subr.mxu0 %v212
        %512 = vmatpush1.msra.mxu0 %v211
        %513 = vmatprep.subr.mxu0 %v220
        %514 = vmatpush1.msra.mxu0 %v219
        %515 = vmatprep.subr.mxu0 %v228
        %516 = vmatpush1.msra.mxu0 %v227
        %517 = vmatprep.subr.mxu0 %v236
        %518 = vmatpush1.msra.mxu0 %v235
        %519 = vmatprep.subr.mxu0 %v244
        %520 = vmatpush1.msra.mxu0 %v243
        %521 = vmatprep.subr.mxu0 %v252
        %522 = vmatpush1.msra.mxu0 %v251
        %523 = vmatprep.subr.mxu0 %v260
        %524 = vmatpush1.msra.mxu0 %v259
        %525 = vmatprep.subr.mxu0 %v268
        %526 = vmatpush1.msra.mxu0 %v267
        %527 = vmatprep.subr.mxu0 %v276
        %528 = vmatpush1.msra.mxu0 %v275
        %529 = vmatprep.subr.mxu0 %v284
        %530 = vmatpush1.msra.mxu0 %v283
        %531 = vmatprep.subr.mxu0 %v292
        %532 = vmatpush1.msra.mxu0 %v291
        %533 = vmatprep.subr.mxu0 %v300
        %534 = vmatpush1.msra.mxu0 %v299
        %535 = vmatprep.subr.mxu0 %v347
        %536 = vmatpush1.msra.mxu0 %v344
        %537 = vmatprep.subr.mxu0 0.0
        %538 = vmatpush1.msra.mxu0 0.0
        %539 = vmatprep.subr.mxu0 0.0
        %540 = vmatpush1.msra.mxu0 0.0
        %541 = vmatprep.subr.mxu0 0.0
        %542 = vmatpush1.msra.mxu0 0.0
        %543 = vmatprep.subr.mxu0 0.0
        %544 = vmatpush1.msra.mxu0 0.0
        %545 = vmatprep.subr.mxu0 0.0
        %546 = vmatpush1.msra.mxu0 0.0
        %547 = vmatprep.subr.mxu0 0.0
        %548 = vmatpush1.msra.mxu0 0.0
        %549 = vmatprep.subr.mxu0 0.0
        %550 = vmatpush1.msra.mxu0 0.0
        %551 = vmatprep.subr.mxu0 0.0
        %552 = vmatpush1.msra.mxu0 0.0
        %553 = vmatprep.subr.mxu0 0.0
        %554 = vmatpush1.msra.mxu0 0.0
        %555 = vmatprep.subr.mxu0 0.0
        %556 = vmatpush1.msra.mxu0 0.0
        %557 = vmatprep.subr.mxu0 0.0
        %558 = vmatpush1.msra.mxu0 0.0
        %559 = vmatprep.subr.mxu0 0.0
        %560 = vmatpush1.msra.mxu0 0.0
        %561 = vmatprep.subr.mxu0 0.0
        %562 = vmatpush1.msra.mxu0 0.0
        %563 = vmatprep.subr.mxu0 0.0
        %564 = vmatpush1.msra.mxu0 0.0
        %565 = vmatprep.subr.mxu0 0.0
        %566 = vmatpush1.msra.mxu0 0.0
        %567 = vmatprep.subr.mxu0 0.0
        %568 = vmatpush1.msra.mxu0 0.0
        %569 = vmatprep.subr.mxu0 0.0
        %570 = vmatpush1.msra.mxu0 0.0
        %571 = vmatprep.subr.mxu0 0.0
        %572 = vmatpush1.msra.mxu0 0.0
        %573 = vmatprep.mubr.f32.mxu0 0.0
        %574 = vmatmul.mubr.f32.gmra.mrb[0].mxu0 %v325
        %v575 = vpop.f32.mrb[0].mxu0
        %v576 = vadd.f32 %v316, %v575
        %v577 = vpop.f32.mrb[0].mxu0
        %v578 = vadd.f32 %v316, %v577
        %579 = vmatprep.mubr.f32.mxu0 0.0
        %580 = vmatmul.mubr.f32.gmra.mrb[0].mxu0 %v328
        %v581 = vpop.f32.mrb[0].mxu0
        %v582 = vadd.f32 %v321, %v581
        %v583 = vpop.f32.mrb[0].mxu0
        %v584 = vadd.f32 %v321, %v583
        %585 = vdwg.mxu0
        %586 = vmatprep.subr.mxu0 %v206
        %587 = vmatpush1.msra.mxu0 %v205
        %588 = vmatprep.subr.mxu0 %v214
        %589 = vmatpush1.msra.mxu0 %v213
        %590 = vmatprep.subr.mxu0 %v222
        %591 = vmatpush1.msra.mxu0 %v221
        %592 = vmatprep.subr.mxu0 %v230
        %593 = vmatpush1.msra.mxu0 %v229
        %594 = vmatprep.subr.mxu0 %v238
        %595 = vmatpush1.msra.mxu0 %v237
        %596 = vmatprep.subr.mxu0 %v246
        %597 = vmatpush1.msra.mxu0 %v245
        %598 = vmatprep.subr.mxu0 %v254
        %599 = vmatpush1.msra.mxu0 %v253
        %600 = vmatprep.subr.mxu0 %v262
        %601 = vmatpush1.msra.mxu0 %v261
        %602 = vmatprep.subr.mxu0 %v270
        %603 = vmatpush1.msra.mxu0 %v269
        %604 = vmatprep.subr.mxu0 %v278
        %605 = vmatpush1.msra.mxu0 %v277
        %606 = vmatprep.subr.mxu0 %v286
        %607 = vmatpush1.msra.mxu0 %v285
        %608 = vmatprep.subr.mxu0 %v294
        %609 = vmatpush1.msra.mxu0 %v293
        %610 = vmatprep.subr.mxu0 %v302
        %611 = vmatpush1.msra.mxu0 %v301
        %612 = vmatprep.subr.mxu0 %v353
        %613 = vmatpush1.msra.mxu0 %v350
        %614 = vmatprep.subr.mxu0 0.0
        %615 = vmatpush1.msra.mxu0 0.0
        %616 = vmatprep.subr.mxu0 0.0
        %617 = vmatpush1.msra.mxu0 0.0
        %618 = vmatprep.subr.mxu0 0.0
        %619 = vmatpush1.msra.mxu0 0.0
        %620 = vmatprep.subr.mxu0 0.0
        %621 = vmatpush1.msra.mxu0 0.0
        %622 = vmatprep.subr.mxu0 0.0
        %623 = vmatpush1.msra.mxu0 0.0
        %624 = vmatprep.subr.mxu0 0.0
        %625 = vmatpush1.msra.mxu0 0.0
        %626 = vmatprep.subr.mxu0 0.0
        %627 = vmatpush1.msra.mxu0 0.0
        %628 = vmatprep.subr.mxu0 0.0
        %629 = vmatpush1.msra.mxu0 0.0
        %630 = vmatprep.subr.mxu0 0.0
        %631 = vmatpush1.msra.mxu0 0.0
        %632 = vmatprep.subr.mxu0 0.0
        %633 = vmatpush1.msra.mxu0 0.0
        %634 = vmatprep.subr.mxu0 0.0
        %635 = vmatpush1.msra.mxu0 0.0
        %636 = vmatprep.subr.mxu0 0.0
        %637 = vmatpush1.msra.mxu0 0.0
        %638 = vmatprep.subr.mxu0 0.0
        %639 = vmatpush1.msra.mxu0 0.0
        %640 = vmatprep.subr.mxu0 0.0
        %641 = vmatpush1.msra.mxu0 0.0
        %642 = vmatprep.subr.mxu0 0.0
        %643 = vmatpush1.msra.mxu0 0.0
        %644 = vmatprep.subr.mxu0 0.0
        %645 = vmatpush1.msra.mxu0 0.0
        %646 = vmatprep.subr.mxu0 0.0
        %647 = vmatpush1.msra.mxu0 0.0
        %648 = vmatprep.subr.mxu0 0.0
        %649 = vmatpush1.msra.mxu0 0.0
        %650 = vmatprep.mubr.f32.mxu0 0.0
        %651 = vmatmul.mubr.f32.gmra.mrb[0].mxu0 %v325
        %v652 = vpop.f32.mrb[0].mxu0
        %v653 = vadd.f32 %v316, %v652
        %v654 = vpop.f32.mrb[0].mxu0
        %v655 = vadd.f32 %v316, %v654
        %656 = vmatprep.mubr.f32.mxu0 0.0
        %657 = vmatmul.mubr.f32.gmra.mrb[0].mxu0 %v328
        %v658 = vpop.f32.mrb[0].mxu0
        %v659 = vadd.f32 %v321, %v658
        %v660 = vpop.f32.mrb[0].mxu0
        %v661 = vadd.f32 %v321, %v660
        %662 = vdwg.mxu0
        %v663 = vtanh.pop %v422
        %664 = vst [vmem:[#allocation2] sm:$0xff] %v663
        %v665 = vxor.u32 %v428, 2147483648
        %v666 = vmul.f32 %v665, 1.442695
        %v667 = vpow.pop %v666
        %v668 = vadd.f32 %v667, 1.0
        %v669 = vrcp.pop %v668
        %v670 = vmul.f32 1.0, %v669
        %671 = vst [vmem:[#allocation3] sm:$0xff] %v670
        %v672 = vtanh.pop %v424
        %s673 = scalar_lea.vmem [#allocation2], 8
        %674 = vst [vmem:[%s673] sm:$0xff] %v672
        %v675 = vxor.u32 %v430, 2147483648
        %v676 = vmul.f32 %v675, 1.442695
        %v677 = vpow.pop %v676
        %v678 = vadd.f32 %v677, 1.0
        %v679 = vrcp.pop %v678
        %v680 = vmul.f32 1.0, %v679
        %s681 = scalar_lea.vmem [#allocation3], 8
        %682 = vst [vmem:[%s681] sm:$0xff] %v680
        %v683 = vtanh.pop %v499
        %s684 = scalar_lea.vmem [#allocation2], 16
        %685 = vst [vmem:[%s684] sm:$0xff] %v683
        %v686 = vxor.u32 %v505, 2147483648
        %v687 = vmul.f32 %v686, 1.442695
        %v688 = vpow.pop %v687
        %v689 = vadd.f32 %v688, 1.0
        %v690 = vrcp.pop %v689
        %v691 = vmul.f32 1.0, %v690
        %s692 = scalar_lea.vmem [#allocation3], 16
        %693 = vst [vmem:[%s692] sm:$0xff] %v691
        %v694 = vtanh.pop %v501
        %s695 = scalar_lea.vmem [#allocation2], 24
        %696 = vst [vmem:[%s695] sm:$0xff] %v694
        %v697 = vxor.u32 %v507, 2147483648
        %v698 = vmul.f32 %v697, 1.442695
        %v699 = vpow.pop %v698
        %v700 = vadd.f32 %v699, 1.0
        %v701 = vrcp.pop %v700
        %v702 = vmul.f32 1.0, %v701
        %s703 = scalar_lea.vmem [#allocation3], 24
        %704 = vst [vmem:[%s703] sm:$0xff] %v702
        %v705 = vtanh.pop %v576
        %s706 = scalar_lea.vmem [#allocation2], 32
        %707 = vst [vmem:[%s706] sm:$0xff] %v705
        %v708 = vxor.u32 %v582, 2147483648
        %v709 = vmul.f32 %v708, 1.442695
        %v710 = vpow.pop %v709
        %v711 = vadd.f32 %v710, 1.0
        %v712 = vrcp.pop %v711
        %v713 = vmul.f32 1.0, %v712
        %s714 = scalar_lea.vmem [#allocation3], 32
        %715 = vst [vmem:[%s714] sm:$0xff] %v713
        %v716 = vtanh.pop %v578
        %s717 = scalar_lea.vmem [#allocation2], 40
        %718 = vst [vmem:[%s717] sm:$0xff] %v716
        %v719 = vxor.u32 %v584, 2147483648
        %v720 = vmul.f32 %v719, 1.442695
        %v721 = vpow.pop %v720
        %v722 = vadd.f32 %v721, 1.0
        %v723 = vrcp.pop %v722
        %v724 = vmul.f32 1.0, %v723
        %s725 = scalar_lea.vmem [#allocation3], 40
        %726 = vst [vmem:[%s725] sm:$0xff] %v724
        %v727 = vtanh.pop %v653
        %s728 = scalar_lea.vmem [#allocation2], 48
        %729 = vst [vmem:[%s728] sm:$0xff] %v727
        %v730 = vxor.u32 %v659, 2147483648
        %v731 = vmul.f32 %v730, 1.442695
        %v732 = vpow.pop %v731
        %v733 = vadd.f32 %v732, 1.0
        %v734 = vrcp.pop %v733
        %v735 = vmul.f32 1.0, %v734
        %s736 = scalar_lea.vmem [#allocation3], 48
        %737 = vst [vmem:[%s736] sm:$0xff] %v735
        %v738 = vtanh.pop %v655
        %s739 = scalar_lea.vmem [#allocation2], 56
        %740 = vst [vmem:[%s739] sm:$0xff] %v738
        %v741 = vxor.u32 %v661, 2147483648
        %v742 = vmul.f32 %v741, 1.442695
        %v743 = vpow.pop %v742
        %v744 = vadd.f32 %v743, 1.0
        %v745 = vrcp.pop %v744
        %v746 = vmul.f32 1.0, %v745
        %s747 = scalar_lea.vmem [#allocation3], 56
        %748 = vst [vmem:[%s747] sm:$0xff] %v746
        %v749 = vld [vmem:[#allocation3] sm:$0xff]
        %v750 = vmul.f32 %v749, 0.0
        %v751 = vsub.f32 1.0, %v749
        %v752 = vld [vmem:[#allocation2] sm:$0xff]
        %v753 = vmul.f32 %v751, %v752
        %v754 = vadd.f32 %v750, %v753
        %755 = vst [vmem:[%s187] sm:$0xff] %v754
        %v756 = vld [vmem:[%s681] sm:$0xff]
        %v757 = vmul.f32 %v756, %v754
        %v758 = vsub.f32 1.0, %v756
        %v759 = vld [vmem:[%s673] sm:$0xff]
        %v760 = vmul.f32 %v758, %v759
        %v761 = vadd.f32 %v757, %v760
        %s762 = scalar_lea.vmem %s187, 8 [#allocation4]
        %763 = vst [vmem:[%s762] sm:$0xff] %v761
        %v764 = vld [vmem:[%s692] sm:$0xff]
        %v765 = vmul.f32 %v764, %v761
        %v766 = vsub.f32 1.0, %v764
        %v767 = vld [vmem:[%s684] sm:$0xff]
        %v768 = vmul.f32 %v766, %v767
        %v769 = vadd.f32 %v765, %v768
        %s770 = scalar_lea.vmem %s187, 16 [#allocation4]
        %771 = vst [vmem:[%s770] sm:$0xff] %v769
        %v772 = vld [vmem:[%s703] sm:$0xff]
        %v773 = vmul.f32 %v772, %v769
        %v774 = vsub.f32 1.0, %v772
        %v775 = vld [vmem:[%s695] sm:$0xff]
        %v776 = vmul.f32 %v774, %v775
        %v777 = vadd.f32 %v773, %v776
        %s778 = scalar_lea.vmem %s187, 24 [#allocation4]
        %779 = vst [vmem:[%s778] sm:$0xff] %v777
        %v780 = vld [vmem:[%s714] sm:$0xff]
        %v781 = vmul.f32 %v780, %v777
        %v782 = vsub.f32 1.0, %v780
        %v783 = vld [vmem:[%s706] sm:$0xff]
        %v784 = vmul.f32 %v782, %v783
        %v785 = vadd.f32 %v781, %v784
        %s786 = scalar_lea.vmem %s187, 32 [#allocation4]
        %787 = vst [vmem:[%s786] sm:$0xff] %v785
        %v788 = vld [vmem:[%s725] sm:$0xff]
        %v789 = vmul.f32 %v788, %v785
        %v790 = vsub.f32 1.0, %v788
        %v791 = vld [vmem:[%s717] sm:$0xff]
        %v792 = vmul.f32 %v790, %v791
        %v793 = vadd.f32 %v789, %v792
        %s794 = scalar_lea.vmem %s187, 40 [#allocation4]
        %795 = vst [vmem:[%s794] sm:$0xff] %v793
        %v796 = vld [vmem:[%s736] sm:$0xff]
        %v797 = vmul.f32 %v796, %v793
        %v798 = vsub.f32 1.0, %v796
        %v799 = vld [vmem:[%s728] sm:$0xff]
        %v800 = vmul.f32 %v798, %v799
        %v801 = vadd.f32 %v797, %v800
        %s802 = scalar_lea.vmem %s187, 48 [#allocation4]
        %803 = vst [vmem:[%s802] sm:$0xff] %v801
        %v804 = vld [vmem:[%s747] sm:$0xff]
        %v805 = vmul.f32 %v804, %v801
        %v806 = vsub.f32 1.0, %v804
        %v807 = vld [vmem:[%s739] sm:$0xff]
        %v808 = vmul.f32 %v806, %v807
        %v809 = vadd.f32 %v805, %v808
        %s810 = scalar_lea.vmem %s187, 56 [#allocation4]
        %811 = vst [vmem:[%s810] sm:$0xff] %v809
        %s812 = sand.u32 %s109, 1
        %s813 = scalar_lea.sflag [#allocation5], %s812
        %s814 = sand.u32 %s109, 1
        %s815 = smul.addr %s814, 64
        %s816 = scalar_lea.vmem [#allocation4], %s815
        // Predicated region
        $region33: #{tpu_custom_call.1} parent=31 // pred_check
          %p817 = pneg %p119
        $region34: #{tpu_custom_call.1} parent=31 // pred_check_branch
          %819 = sbr.rel (%p817) target = $region36
        $region35: #{tpu_custom_call.1} parent=31 // pred_region
          %s821 = ssub.s32 1024, 1024
          %822 = vsyncadd %s813, %s821
          %s823 = smul.addr %s22, 8
          %s824 = smul.addr %s21, 16
          %s825 = sadd.s32 %s823, %s824
          %s826 = smul.addr %s825, 128
          %s827 = scalar_lea.hbm %s3, %s826
          %s828 = sshll.u32 %s816, 4
          %s829 = int_to_ptr.vmem [resolvable:$true] %s828
          %834 = dma.vmem_to_hbm [thread:$0]  %s829, 1024, %s827, %s813, 128, 128, 8
        $region36: #{tpu_custom_call.1} parent=31 // pred_fallthru
          _
      $region32: #{tpu_custom_call.1} parent=5 // pred_fallthru
        _
      %p835 = scmp.le.s32.totalorder 2, %s12
      // Predicated region
      $region37: #{tpu_custom_call.1} parent=5 // pred_check
        %p836 = pneg %p835
      $region38: #{tpu_custom_call.1} parent=5 // pred_check_branch
        %838 = sbr.rel (%p836) target = $region40
      $region39: #{tpu_custom_call.1} parent=5 // pred_region
        %s839 = ssub.s32 %s12, 2
        // Predicated region
        $region41: #{tpu_custom_call.1} parent=39 // pred_check
          %p840 = pneg %p125
        $region42: #{tpu_custom_call.1} parent=39 // pred_check_branch
          %842 = sbr.rel (%p840) target = $region44
        $region43: #{tpu_custom_call.1} parent=39 // pred_region
          %s843 = sand.u32 %s110, 1
          %s844 = scalar_lea.sflag [#allocation5], %s843
          %s845 = sand.u32 %s110, 1
          %s846 = smul.addr %s845, 64
          %s847 = scalar_lea.vmem [#allocation4], %s846
          %848 = dma.done %s844, 1024
        $region44: #{tpu_custom_call.1} parent=39 // pred_fallthru
          _
      $region40: #{tpu_custom_call.1} parent=5 // pred_fallthru
        _
    $region6: #{tpu_custom_call.1} parent=1 // loop_footer
      %s16 = sadd.s32 1, %s12
    $region7: #{tpu_custom_call.1} parent=1 // loop_footer_branch
      %11 = sbr.rel target = $region3
    $region8: #{tpu_custom_call.1} parent=1 // loop_exit
      _
    %849 = vsyncpa [#allocation5], 1
    %s850 = scalar_lea.sflag [#allocation5], 1
    %851 = vsyncpa %s850, 1

</llo_original>
